<compile_context>
chip_gen: v6e
topology: v6e:2x2x1
jax: 0.10.0
libtpu: 0.0.40
codegen_flags: <defaults>
</compile_context>

<pallas_src>
import jax
import jax.numpy as jnp
from jax.experimental import pallas as pl
from jax.experimental.pallas import tpu as pltpu

USER_EMB = 16
ITEM_EMB = 16
N_ITEM_FEAT = 1 + 384            # dense item features after the id column
ITEM_COLS = 1 + N_ITEM_FEAT      # dataItem width = 386
ITEM_IN = ITEM_EMB + N_ITEM_FEAT # torch Linear in-features = 401
TB_DEFAULT = 128                 # batch tile (multiple of 8; 128-aligned)


def _round_up(x, m):
    return (x + m - 1) // m * m


def _two_tower_kernel(xu_ref, embi_ref, feat_ref,
                      w1u_ref, b1u_ref, w2u_ref, b2u_ref,
                      w1i_emb_ref, w1i_feat_ref, b1i_ref, w2i_ref, b2i_ref,
                      wc1u_ref, wc1i_ref, bc1_ref, wc2_ref, bc2_ref,
                      out_ref):
    f32 = jnp.float32

    # --- user tower: Linear(16,16) -> ReLU -> Linear(16,16) (f32, tiny) ---
    xu = xu_ref[...]                                              # (TB, 16)
    hu = jnp.maximum(
        jnp.dot(xu, w1u_ref[...], preferred_element_type=f32) + b1u_ref[...],
        0.0)
    lu = jnp.dot(hu, w2u_ref[...], preferred_element_type=f32) + b2u_ref[...]

    # --- item tower: Linear(401,128) -> ReLU -> Linear(128,16) ------------
    # Split matmul == concat(embi, dataItem[:,1:]) @ W1i  (id row is zero).
    hi = jnp.dot(embi_ref[...], w1i_emb_ref[...], preferred_element_type=f32)
    hi = hi + jnp.dot(feat_ref[...], w1i_feat_ref[...],
                      preferred_element_type=f32)
    hi = jnp.maximum(hi + b1i_ref[...], 0.0)                      # (TB, 128) f32
    li = jnp.dot(hi.astype(w2i_ref.dtype), w2i_ref[...],
                 preferred_element_type=f32) + b2i_ref[...]       # (TB, 16)

    # --- classifier: cat(lu, li) @ Wc1 == lu @ Wc1[:16] + li @ Wc1[16:] ---
    h = jnp.maximum(
        jnp.dot(lu, wc1u_ref[...], preferred_element_type=f32)
        + jnp.dot(li, wc1i_ref[...], preferred_element_type=f32)
        + bc1_ref[...], 0.0)                                      # (TB, 32)
    out_ref[...] = (jnp.dot(h, wc2_ref[...], preferred_element_type=f32)
                    + bc2_ref[...])                               # (TB, 2)


def cls_model_forward(dataUser, dataItem, params, *,
                      tb=TB_DEFAULT, item_matmul_dtype=None):
    """Equivalent of cls_model.forward(dataUser, dataItem)."""
    B = dataUser.shape[0]
    assert dataItem.shape[0] == B
    assert dataUser.shape[1] == 1, "user tower expects dataUser = (B, 1) ids"
    assert dataItem.shape[1] == ITEM_COLS

    f32 = jnp.float32

    # --- glue: embedding gathers only (no big concat materialization) ----
    user_ids = dataUser[:, 0].astype(jnp.int32)
    item_ids = dataItem[:, 0].astype(jnp.int32)
    embu = jnp.take(params["user_emb"], user_ids, axis=0)         # (B, 16) == inputU
    embi = jnp.take(params["item_emb"], item_ids, axis=0)         # (B, 16)
    xi_feat = dataItem                                            # (B, 386) raw

    # --- weights: PyTorch (out, in) -> kernel (in, out); split W1i / Wc1 --
    w1u = params["w1u"].T.astype(f32); b1u = params["b1u"][None, :].astype(f32)
    w2u = params["w2u"].T.astype(f32); b2u = params["b2u"][None, :].astype(f32)

    w1i_io = params["w1i"].T.astype(f32)                          # (401, 128)
    w1i_emb = w1i_io[:ITEM_EMB]                                   # (16, 128)
    # zero row for the id column so the raw dataItem can be the operand
    w1i_feat = jnp.concatenate(
        [jnp.zeros((1, w1i_io.shape[1]), f32), w1i_io[ITEM_EMB:]], axis=0)  # (386,128)
    b1i = params["b1i"][None, :].astype(f32)
    w2i = params["w2i"].T.astype(f32); b2i = params["b2i"][None, :].astype(f32)

    wc1_io = params["wc1"].T.astype(f32)                          # (32, 32)
    wc1u = wc1_io[:USER_EMB]                                      # (16, 32)
    wc1i = wc1_io[USER_EMB:]                                      # (16, 32)
    bc1 = params["bc1"][None, :].astype(f32)
    wc2 = params["wc2"].T.astype(f32); bc2 = params["bc2"][None, :].astype(f32)

    # Optional bf16 item-tower matmul operands (v6e/v7x); accumulation stays
    # f32 inside the kernel, bias add / ReLU stay f32 (v5e-friendly).
    if item_matmul_dtype is not None:
        xi_feat = xi_feat.astype(item_matmul_dtype)
        embi = embi.astype(item_matmul_dtype)
        w1i_emb = w1i_emb.astype(item_matmul_dtype)
        w1i_feat = w1i_feat.astype(item_matmul_dtype)
        w2i = w2i.astype(item_matmul_dtype)

    # --- batch tiling: pad B up to a multiple of the tile if needed -------
    tb = max(8, min(tb, _round_up(B, 8)))
    pb = _round_up(B, tb)
    if pb != B:
        pad = pb - B
        embu = jnp.pad(embu, ((0, pad), (0, 0)))
        embi = jnp.pad(embi, ((0, pad), (0, 0)))
        xi_feat = jnp.pad(xi_feat, ((0, pad), (0, 0)))

    grid = (pb // tb,)

    def batch_spec(width):
        return pl.BlockSpec((tb, width), lambda i: (i, 0))

    def full_spec(arr):
        s = arr.shape
        return pl.BlockSpec(s, lambda i: (0,) * len(s))

    in_specs = [
        batch_spec(USER_EMB),                 # xu  (== embu)
        batch_spec(ITEM_EMB),                 # embi
        # NOTE: if a profile ever shows exposed DMA on this stream, add
        # pipeline_mode=pl.Buffered(3) here; currently bandwidth-bound so
        # deeper buffering would not add bandwidth.
        batch_spec(ITEM_COLS),                # dataItem features
        full_spec(w1u), full_spec(b1u), full_spec(w2u), full_spec(b2u),
        full_spec(w1i_emb), full_spec(w1i_feat), full_spec(b1i),
        full_spec(w2i), full_spec(b2i),
        full_spec(wc1u), full_spec(wc1i), full_spec(bc1),
        full_spec(wc2), full_spec(bc2),
    ]
    out_specs = pl.BlockSpec((tb, 2), lambda i: (i, 0))

    out = pl.pallas_call(
        _two_tower_kernel,
        out_shape=jax.ShapeDtypeStruct((pb, 2), jnp.float32),
        grid_spec=pltpu.PrefetchScalarGridSpec(
            num_scalar_prefetch=0,
            grid=grid,
            in_specs=in_specs,
            out_specs=out_specs,
        ),
        compiler_params=pltpu.CompilerParams(
            dimension_semantics=("parallel",)),
    )(embu, embi, xi_feat,
      w1u, b1u, w2u, b2u,
      w1i_emb, w1i_feat, b1i, w2i, b2i,
      wc1u, wc1i, bc1, wc2, bc2)

    if pb != B:
        out = out[:B]
    return out


def cls_model_forward_ref(dataUser, dataItem, params):
    """Pure-JAX reference (mirrors the PyTorch forward exactly)."""
    user_ids = dataUser[:, 0].astype(jnp.int32)
    item_ids = dataItem[:, 0].astype(jnp.int32)
    embu = jnp.take(params["user_emb"], user_ids, axis=0)
    embi = jnp.take(params["item_emb"], item_ids, axis=0)
    inputU = jnp.concatenate([embu, dataUser[:, 1:]], axis=1)
    inputI = jnp.concatenate([embi, dataItem[:, 1:]], axis=1)
    hu = jnp.maximum(inputU @ params["w1u"].T + params["b1u"], 0.0)
    lu = hu @ params["w2u"].T + params["b2u"]
    hi = jnp.maximum(inputI @ params["w1i"].T + params["b1i"], 0.0)
    li = hi @ params["w2i"].T + params["b2i"]
    x = jnp.concatenate([lu, li], axis=1)
    h = jnp.maximum(x @ params["wc1"].T + params["bc1"], 0.0)
    return h @ params["wc2"].T + params["bc2"]


def init_params(key, user_count, item_count):
    ks = jax.random.split(key, 16)

    def lin(kw, kb, out_f, in_f, scale=0.05):
        return (scale * jax.random.normal(kw, (out_f, in_f), jnp.float32),
                scale * jax.random.normal(kb, (out_f,), jnp.float32))

    p = {}
    p["user_emb"] = 0.1 * jax.random.normal(ks[0], (user_count + 1, USER_EMB), jnp.float32)
    p["item_emb"] = 0.1 * jax.random.normal(ks[1], (item_count + 1, ITEM_EMB), jnp.float32)
    p["w1u"], p["b1u"] = lin(ks[2], ks[3], 16, USER_EMB)
    p["w2u"], p["b2u"] = lin(ks[4], ks[5], 16, 16)
    p["w1i"], p["b1i"] = lin(ks[6], ks[7], 128, ITEM_IN)
    p["w2i"], p["b2i"] = lin(ks[8], ks[9], 16, 128)
    p["wc1"], p["bc1"] = lin(ks[10], ks[11], 32, 32)
    p["wc2"], p["bc2"] = lin(ks[12], ks[13], 2, 32)
    return p


if __name__ == "__main__":
    key = jax.random.PRNGKey(0)
    k_param, k_uid, k_iid, k_feat = jax.random.split(key, 4)

    # Small demo: B = 256 with TB = 128 -> 2 parallel grid steps (both v7x
    # TensorCores get work) while inputs stay tiny (~400 KB of item features).
    B = 256
    user_count, item_count = 10, 20
    params = init_params(k_param, user_count, item_count)

    # dataUser: (B, 1) — just the user id (as float, cast to int in forward).
    dataUser = jax.random.randint(k_uid, (B, 1), 0, user_count + 1).astype(jnp.float32)
    # dataItem: (B, 386) — item id followed by 385 dense features.
    item_ids = jax.random.randint(k_iid, (B, 1), 0, item_count + 1).astype(jnp.float32)
    item_feats = jax.random.normal(k_feat, (B, N_ITEM_FEAT), jnp.float32)
    dataItem = jnp.concatenate([item_ids, item_feats], axis=1)

    ref = cls_model_forward_ref(dataUser, dataItem, params)

    # Default f32 path — tight tolerance.
    out = jax.block_until_ready(
        cls_model_forward(dataUser, dataItem, params, tb=128))
    assert out.shape == (B, 2)
    assert jnp.allclose(out, ref, rtol=1e-4, atol=1e-4), \
        float(jnp.max(jnp.abs(out - ref)))

    print("KERNEL_OK")
</pallas_src>

<mosaic_0001>
module attributes {stable_mosaic.version = 11 : i64} {
  func.func @_two_tower_kernel(%arg0: i32, %arg1: memref<128x16xf32, #tpu.memory_space<vmem>>, %arg2: memref<128x16xf32, #tpu.memory_space<vmem>>, %arg3: memref<128x386xf32, #tpu.memory_space<vmem>>, %arg4: memref<16x16xf32, #tpu.memory_space<vmem>>, %arg5: memref<1x16xf32, #tpu.memory_space<vmem>>, %arg6: memref<16x16xf32, #tpu.memory_space<vmem>>, %arg7: memref<1x16xf32, #tpu.memory_space<vmem>>, %arg8: memref<16x128xf32, #tpu.memory_space<vmem>>, %arg9: memref<386x128xf32, #tpu.memory_space<vmem>>, %arg10: memref<1x128xf32, #tpu.memory_space<vmem>>, %arg11: memref<128x16xf32, #tpu.memory_space<vmem>>, %arg12: memref<1x16xf32, #tpu.memory_space<vmem>>, %arg13: memref<16x32xf32, #tpu.memory_space<vmem>>, %arg14: memref<16x32xf32, #tpu.memory_space<vmem>>, %arg15: memref<1x32xf32, #tpu.memory_space<vmem>>, %arg16: memref<32x2xf32, #tpu.memory_space<vmem>>, %arg17: memref<1x2xf32, #tpu.memory_space<vmem>>, %arg18: memref<128x2xf32, #tpu.memory_space<vmem>>) attributes {dimension_semantics = [#tpu.dimension_semantics<parallel>], iteration_bounds = array<i64: 2>, scalar_prefetch = 0 : i64, scratch_operands = 0 : i64, tpu.core_type = #tpu.core_type<tc>, window_params = [{transform_indices = @transform_0, window_bounds = array<i64: 128, 16>}, {transform_indices = @transform_1, window_bounds = array<i64: 128, 16>}, {transform_indices = @transform_2, window_bounds = array<i64: 128, 386>}, {pipeline_mode = #tpu.pipeline_mode<synchronous>, transform_indices = @transform_3, window_bounds = array<i64: 16, 16>}, {pipeline_mode = #tpu.pipeline_mode<synchronous>, transform_indices = @transform_4, window_bounds = array<i64: 1, 16>}, {pipeline_mode = #tpu.pipeline_mode<synchronous>, transform_indices = @transform_5, window_bounds = array<i64: 16, 16>}, {pipeline_mode = #tpu.pipeline_mode<synchronous>, transform_indices = @transform_6, window_bounds = array<i64: 1, 16>}, {pipeline_mode = #tpu.pipeline_mode<synchronous>, transform_indices = @transform_7, window_bounds = array<i64: 16, 128>}, {pipeline_mode = #tpu.pipeline_mode<synchronous>, transform_indices = @transform_8, window_bounds = array<i64: 386, 128>}, {pipeline_mode = #tpu.pipeline_mode<synchronous>, transform_indices = @transform_9, window_bounds = array<i64: 1, 128>}, {pipeline_mode = #tpu.pipeline_mode<synchronous>, transform_indices = @transform_10, window_bounds = array<i64: 128, 16>}, {pipeline_mode = #tpu.pipeline_mode<synchronous>, transform_indices = @transform_11, window_bounds = array<i64: 1, 16>}, {pipeline_mode = #tpu.pipeline_mode<synchronous>, transform_indices = @transform_12, window_bounds = array<i64: 16, 32>}, {pipeline_mode = #tpu.pipeline_mode<synchronous>, transform_indices = @transform_13, window_bounds = array<i64: 16, 32>}, {pipeline_mode = #tpu.pipeline_mode<synchronous>, transform_indices = @transform_14, window_bounds = array<i64: 1, 32>}, {pipeline_mode = #tpu.pipeline_mode<synchronous>, transform_indices = @transform_15, window_bounds = array<i64: 32, 2>}, {pipeline_mode = #tpu.pipeline_mode<synchronous>, transform_indices = @transform_16, window_bounds = array<i64: 1, 2>}, {transform_indices = @transform_17, window_bounds = array<i64: 128, 2>}]} {
    %c0 = arith.constant 0 : index
    %c0_0 = arith.constant 0 : index
    %0 = vector.load %arg1[%c0, %c0_0] : memref<128x16xf32, #tpu.memory_space<vmem>>, vector<128x16xf32>
    %c0_1 = arith.constant 0 : index
    %c0_2 = arith.constant 0 : index
    %1 = vector.load %arg4[%c0_1, %c0_2] : memref<16x16xf32, #tpu.memory_space<vmem>>, vector<16x16xf32>
    %cst = arith.constant dense<0.000000e+00> : vector<128x16xf32>
    %2 = tpu.matmul %0, %1, %cst {dimension_numbers = #tpu.dot_dimension_numbers<[1], [0], [0], [1], [0, 0, 1, 1], [], []>} : vector<128x16xf32>, vector<16x16xf32>, vector<128x16xf32> -> vector<128x16xf32>
    %c0_3 = arith.constant 0 : index
    %c0_4 = arith.constant 0 : index
    %3 = vector.load %arg5[%c0_3, %c0_4] : memref<1x16xf32, #tpu.memory_space<vmem>>, vector<1x16xf32>
    %4 = vector.broadcast %3 : vector<1x16xf32> to vector<128x16xf32>
    %5 = arith.addf %2, %4 : vector<128x16xf32>
    %cst_5 = arith.constant 0.000000e+00 : f32
    %6 = vector.broadcast %cst_5 : f32 to vector<128x16xf32>
    %7 = arith.maximumf %5, %6 : vector<128x16xf32>
    %c0_6 = arith.constant 0 : index
    %c0_7 = arith.constant 0 : index
    %8 = vector.load %arg6[%c0_6, %c0_7] : memref<16x16xf32, #tpu.memory_space<vmem>>, vector<16x16xf32>
    %cst_8 = arith.constant dense<0.000000e+00> : vector<128x16xf32>
    %9 = tpu.matmul %7, %8, %cst_8 {dimension_numbers = #tpu.dot_dimension_numbers<[1], [0], [0], [1], [0, 0, 1, 1], [], []>} : vector<128x16xf32>, vector<16x16xf32>, vector<128x16xf32> -> vector<128x16xf32>
    %c0_9 = arith.constant 0 : index
    %c0_10 = arith.constant 0 : index
    %10 = vector.load %arg7[%c0_9, %c0_10] : memref<1x16xf32, #tpu.memory_space<vmem>>, vector<1x16xf32>
    %11 = vector.broadcast %10 : vector<1x16xf32> to vector<128x16xf32>
    %12 = arith.addf %9, %11 : vector<128x16xf32>
    %c0_11 = arith.constant 0 : index
    %c0_12 = arith.constant 0 : index
    %13 = vector.load %arg2[%c0_11, %c0_12] : memref<128x16xf32, #tpu.memory_space<vmem>>, vector<128x16xf32>
    %c0_13 = arith.constant 0 : index
    %c0_14 = arith.constant 0 : index
    %14 = vector.load %arg8[%c0_13, %c0_14] : memref<16x128xf32, #tpu.memory_space<vmem>>, vector<16x128xf32>
    %cst_15 = arith.constant dense<0.000000e+00> : vector<128x128xf32>
    %15 = tpu.matmul %13, %14, %cst_15 {dimension_numbers = #tpu.dot_dimension_numbers<[1], [0], [0], [1], [0, 0, 1, 1], [], []>} : vector<128x16xf32>, vector<16x128xf32>, vector<128x128xf32> -> vector<128x128xf32>
    %c0_16 = arith.constant 0 : index
    %c0_17 = arith.constant 0 : index
    %16 = vector.load %arg3[%c0_16, %c0_17] : memref<128x386xf32, #tpu.memory_space<vmem>>, vector<128x386xf32>
    %c0_18 = arith.constant 0 : index
    %c0_19 = arith.constant 0 : index
    %17 = vector.load %arg9[%c0_18, %c0_19] : memref<386x128xf32, #tpu.memory_space<vmem>>, vector<386x128xf32>
    %cst_20 = arith.constant dense<0.000000e+00> : vector<128x128xf32>
    %18 = tpu.matmul %16, %17, %cst_20 {dimension_numbers = #tpu.dot_dimension_numbers<[1], [0], [0], [1], [0, 0, 1, 1], [], []>} : vector<128x386xf32>, vector<386x128xf32>, vector<128x128xf32> -> vector<128x128xf32>
    %19 = arith.addf %15, %18 : vector<128x128xf32>
    %c0_21 = arith.constant 0 : index
    %c0_22 = arith.constant 0 : index
    %20 = vector.load %arg10[%c0_21, %c0_22] : memref<1x128xf32, #tpu.memory_space<vmem>>, vector<1x128xf32>
    %21 = vector.broadcast %20 : vector<1x128xf32> to vector<128x128xf32>
    %22 = arith.addf %19, %21 : vector<128x128xf32>
    %cst_23 = arith.constant 0.000000e+00 : f32
    %23 = vector.broadcast %cst_23 : f32 to vector<128x128xf32>
    %24 = arith.maximumf %22, %23 : vector<128x128xf32>
    %c0_24 = arith.constant 0 : index
    %c0_25 = arith.constant 0 : index
    %25 = vector.load %arg11[%c0_24, %c0_25] : memref<128x16xf32, #tpu.memory_space<vmem>>, vector<128x16xf32>
    %cst_26 = arith.constant dense<0.000000e+00> : vector<128x16xf32>
    %26 = tpu.matmul %24, %25, %cst_26 {dimension_numbers = #tpu.dot_dimension_numbers<[1], [0], [0], [1], [0, 0, 1, 1], [], []>} : vector<128x128xf32>, vector<128x16xf32>, vector<128x16xf32> -> vector<128x16xf32>
    %c0_27 = arith.constant 0 : index
    %c0_28 = arith.constant 0 : index
    %27 = vector.load %arg12[%c0_27, %c0_28] : memref<1x16xf32, #tpu.memory_space<vmem>>, vector<1x16xf32>
    %28 = vector.broadcast %27 : vector<1x16xf32> to vector<128x16xf32>
    %29 = arith.addf %26, %28 : vector<128x16xf32>
    %c0_29 = arith.constant 0 : index
    %c0_30 = arith.constant 0 : index
    %30 = vector.load %arg13[%c0_29, %c0_30] : memref<16x32xf32, #tpu.memory_space<vmem>>, vector<16x32xf32>
    %cst_31 = arith.constant dense<0.000000e+00> : vector<128x32xf32>
    %31 = tpu.matmul %12, %30, %cst_31 {dimension_numbers = #tpu.dot_dimension_numbers<[1], [0], [0], [1], [0, 0, 1, 1], [], []>} : vector<128x16xf32>, vector<16x32xf32>, vector<128x32xf32> -> vector<128x32xf32>
    %c0_32 = arith.constant 0 : index
    %c0_33 = arith.constant 0 : index
    %32 = vector.load %arg14[%c0_32, %c0_33] : memref<16x32xf32, #tpu.memory_space<vmem>>, vector<16x32xf32>
    %cst_34 = arith.constant dense<0.000000e+00> : vector<128x32xf32>
    %33 = tpu.matmul %29, %32, %cst_34 {dimension_numbers = #tpu.dot_dimension_numbers<[1], [0], [0], [1], [0, 0, 1, 1], [], []>} : vector<128x16xf32>, vector<16x32xf32>, vector<128x32xf32> -> vector<128x32xf32>
    %34 = arith.addf %31, %33 : vector<128x32xf32>
    %c0_35 = arith.constant 0 : index
    %c0_36 = arith.constant 0 : index
    %35 = vector.load %arg15[%c0_35, %c0_36] : memref<1x32xf32, #tpu.memory_space<vmem>>, vector<1x32xf32>
    %36 = vector.broadcast %35 : vector<1x32xf32> to vector<128x32xf32>
    %37 = arith.addf %34, %36 : vector<128x32xf32>
    %cst_37 = arith.constant 0.000000e+00 : f32
    %38 = vector.broadcast %cst_37 : f32 to vector<128x32xf32>
    %39 = arith.maximumf %37, %38 : vector<128x32xf32>
    %c0_38 = arith.constant 0 : index
    %c0_39 = arith.constant 0 : index
    %40 = vector.load %arg16[%c0_38, %c0_39] : memref<32x2xf32, #tpu.memory_space<vmem>>, vector<32x2xf32>
    %cst_40 = arith.constant dense<0.000000e+00> : vector<128x2xf32>
    %41 = tpu.matmul %39, %40, %cst_40 {dimension_numbers = #tpu.dot_dimension_numbers<[1], [0], [0], [1], [0, 0, 1, 1], [], []>} : vector<128x32xf32>, vector<32x2xf32>, vector<128x2xf32> -> vector<128x2xf32>
    %c0_41 = arith.constant 0 : index
    %c0_42 = arith.constant 0 : index
    %42 = vector.load %arg17[%c0_41, %c0_42] : memref<1x2xf32, #tpu.memory_space<vmem>>, vector<1x2xf32>
    %43 = vector.broadcast %42 : vector<1x2xf32> to vector<128x2xf32>
    %44 = arith.addf %41, %43 : vector<128x2xf32>
    %c0_43 = arith.constant 0 : index
    %c0_44 = arith.constant 0 : index
    %45 = vector.load %arg18[%c0_43, %c0_44] : memref<128x2xf32, #tpu.memory_space<vmem>>, vector<128x2xf32>
    tpu.vector_store %arg18[%c0_43, %c0_44], %44 {strides = array<i32>} : memref<128x2xf32, #tpu.memory_space<vmem>>, vector<128x2xf32>,
    return
  }
  func.func @transform_0(%arg0: i32) -> (i32, i32) {
    %c0_i32 = arith.constant 0 : i32
    %c0_i32_0 = arith.constant 0 : i32
    return %arg0, %c0_i32 : i32, i32
  }
  func.func @transform_1(%arg0: i32) -> (i32, i32) {
    %c0_i32 = arith.constant 0 : i32
    %c0_i32_0 = arith.constant 0 : i32
    return %arg0, %c0_i32 : i32, i32
  }
  func.func @transform_2(%arg0: i32) -> (i32, i32) {
    %c0_i32 = arith.constant 0 : i32
    %c0_i32_0 = arith.constant 0 : i32
    return %arg0, %c0_i32 : i32, i32
  }
  func.func @transform_3(%arg0: i32) -> (i32, i32) {
    %c0_i32 = arith.constant 0 : i32
    %c0_i32_0 = arith.constant 0 : i32
    %c0_i32_1 = arith.constant 0 : i32
    return %c0_i32, %c0_i32_0 : i32, i32
  }
  func.func @transform_4(%arg0: i32) -> (i32, i32) {
    %c0_i32 = arith.constant 0 : i32
    %c0_i32_0 = arith.constant 0 : i32
    %c0_i32_1 = arith.constant 0 : i32
    return %c0_i32, %c0_i32_0 : i32, i32
  }
  func.func @transform_5(%arg0: i32) -> (i32, i32) {
    %c0_i32 = arith.constant 0 : i32
    %c0_i32_0 = arith.constant 0 : i32
    %c0_i32_1 = arith.constant 0 : i32
    return %c0_i32, %c0_i32_0 : i32, i32
  }
  func.func @transform_6(%arg0: i32) -> (i32, i32) {
    %c0_i32 = arith.constant 0 : i32
    %c0_i32_0 = arith.constant 0 : i32
    %c0_i32_1 = arith.constant 0 : i32
    return %c0_i32, %c0_i32_0 : i32, i32
  }
  func.func @transform_7(%arg0: i32) -> (i32, i32) {
    %c0_i32 = arith.constant 0 : i32
    %c0_i32_0 = arith.constant 0 : i32
    %c0_i32_1 = arith.constant 0 : i32
    return %c0_i32, %c0_i32_0 : i32, i32
  }
  func.func @transform_8(%arg0: i32) -> (i32, i32) {
    %c0_i32 = arith.constant 0 : i32
    %c0_i32_0 = arith.constant 0 : i32
    %c0_i32_1 = arith.constant 0 : i32
    return %c0_i32, %c0_i32_0 : i32, i32
  }
  func.func @transform_9(%arg0: i32) -> (i32, i32) {
    %c0_i32 = arith.constant 0 : i32
    %c0_i32_0 = arith.constant 0 : i32
    %c0_i32_1 = arith.constant 0 : i32
    return %c0_i32, %c0_i32_0 : i32, i32
  }
  func.func @transform_10(%arg0: i32) -> (i32, i32) {
    %c0_i32 = arith.constant 0 : i32
    %c0_i32_0 = arith.constant 0 : i32
    %c0_i32_1 = arith.constant 0 : i32
    return %c0_i32, %c0_i32_0 : i32, i32
  }
  func.func @transform_11(%arg0: i32) -> (i32, i32) {
    %c0_i32 = arith.constant 0 : i32
    %c0_i32_0 = arith.constant 0 : i32
    %c0_i32_1 = arith.constant 0 : i32
    return %c0_i32, %c0_i32_0 : i32, i32
  }
  func.func @transform_12(%arg0: i32) -> (i32, i32) {
    %c0_i32 = arith.constant 0 : i32
    %c0_i32_0 = arith.constant 0 : i32
    %c0_i32_1 = arith.constant 0 : i32
    return %c0_i32, %c0_i32_0 : i32, i32
  }
  func.func @transform_13(%arg0: i32) -> (i32, i32) {
    %c0_i32 = arith.constant 0 : i32
    %c0_i32_0 = arith.constant 0 : i32
    %c0_i32_1 = arith.constant 0 : i32
    return %c0_i32, %c0_i32_0 : i32, i32
  }
  func.func @transform_14(%arg0: i32) -> (i32, i32) {
    %c0_i32 = arith.constant 0 : i32
    %c0_i32_0 = arith.constant 0 : i32
    %c0_i32_1 = arith.constant 0 : i32
    return %c0_i32, %c0_i32_0 : i32, i32
  }
  func.func @transform_15(%arg0: i32) -> (i32, i32) {
    %c0_i32 = arith.constant 0 : i32
    %c0_i32_0 = arith.constant 0 : i32
    %c0_i32_1 = arith.constant 0 : i32
    return %c0_i32, %c0_i32_0 : i32, i32
  }
  func.func @transform_16(%arg0: i32) -> (i32, i32) {
    %c0_i32 = arith.constant 0 : i32
    %c0_i32_0 = arith.constant 0 : i32
    %c0_i32_1 = arith.constant 0 : i32
    return %c0_i32, %c0_i32_0 : i32, i32
  }
  func.func @transform_17(%arg0: i32) -> (i32, i32) {
    %c0_i32 = arith.constant 0 : i32
    %c0_i32_0 = arith.constant 0 : i32
    return %arg0, %c0_i32 : i32, i32
  }
}

</mosaic_0001>

<llo_original>
// kernel: tpu_custom_call.1
$region0: #{tpu_custom_call.1}
  #allocation0 [shape = 'u32[]', space=smem, size = 0x4, offset = 0x4, fixed_abs, tag = 'smem constant byte address 0x4 - core index']
  #allocation1 [shape = 'u32[144,128]{1,0:T(1,128)}', space=vmem, size = 0x12000, scoped, tag = 'internal scratch']
  %s0 = inlined_call_operand.vmem [shape: f32[256,16], index: 0, kind: input, shape index: {}]
  %s1 = inlined_call_operand.vmem [shape: f32[256,16], index: 1, kind: input, shape index: {}]
  %s2 = inlined_call_operand.vmem [shape: f32[256,386], index: 2, kind: input, shape index: {}]
  %s3 = inlined_call_operand.vmem [shape: f32[16,16], index: 3, kind: input, shape index: {}]
  %s4 = inlined_call_operand.vmem [shape: f32[1,16], index: 4, kind: input, shape index: {}]
  %s5 = inlined_call_operand.vmem [shape: f32[16,16], index: 5, kind: input, shape index: {}]
  %s6 = inlined_call_operand.vmem [shape: f32[1,16], index: 6, kind: input, shape index: {}]
  %s7 = inlined_call_operand.vmem [shape: f32[16,128], index: 7, kind: input, shape index: {}]
  %s8 = inlined_call_operand.vmem [shape: f32[386,128], index: 8, kind: input, shape index: {}]
  %s9 = inlined_call_operand.vmem [shape: f32[1,128], index: 9, kind: input, shape index: {}]
  %s10 = inlined_call_operand.vmem [shape: f32[128,16], index: 10, kind: input, shape index: {}]
  %s11 = inlined_call_operand.vmem [shape: f32[1,16], index: 11, kind: input, shape index: {}]
  %s12 = inlined_call_operand.vmem [shape: f32[16,32], index: 12, kind: input, shape index: {}]
  %s13 = inlined_call_operand.vmem [shape: f32[16,32], index: 13, kind: input, shape index: {}]
  %s14 = inlined_call_operand.vmem [shape: f32[1,32], index: 14, kind: input, shape index: {}]
  %s15 = inlined_call_operand.vmem [shape: f32[32,2], index: 15, kind: input, shape index: {}]
  %s16 = inlined_call_operand.vmem [shape: f32[1,2], index: 16, kind: input, shape index: {}]
  %s17 = inlined_call_operand.vmem [shape: f32[256,2], index: 17, kind: output, shape index: {}]
  %s18 = sld [smem:[#allocation0]]
  $region101: #{tpu_custom_call.1} parent=0
    _
  %s20 = ssub.s32 1, %s18
  %s21 = scalar_select 0, %s20, %s18
  loop: start=0, step=1, limit=4
  $region2: #{tpu_custom_call.1} parent=0 // loop_pre_header
    _
  $region3: #{tpu_custom_call.1} parent=0 // loop_header
    %s23 = sphi 0, %s27
    %p24 = scmp.ge.s32.totalorder %s23, 4
    %s33 = sphi 0, %s35
    %s36 = sphi 0, %s33
    %s37 = sphi 0, %s36
    %s53 = sphi 0, %s37
    %s59 = sphi 0, %s61
    %s62 = sphi 0, %s59
    %s63 = sphi 0, %s62
    %s79 = sphi 0, %s63
    %s85 = sphi 0, %s87
    %s88 = sphi 0, %s85
    %s89 = sphi 0, %s88
    %s105 = sphi 0, %s89
    %s109 = sphi 0, %s109
    %s111 = sphi 0, %s109
    %s112 = sphi 0, %s111
    %s126 = sphi 0, %s112
    %s130 = sphi 0, %s130
    %s132 = sphi 0, %s130
    %s133 = sphi 0, %s132
    %s147 = sphi 0, %s133
    %s151 = sphi 0, %s151
    %s153 = sphi 0, %s151
    %s154 = sphi 0, %s153
    %s168 = sphi 0, %s154
    %s172 = sphi 0, %s172
    %s174 = sphi 0, %s172
    %s175 = sphi 0, %s174
    %s189 = sphi 0, %s175
    %s193 = sphi 0, %s193
    %s195 = sphi 0, %s193
    %s196 = sphi 0, %s195
    %s210 = sphi 0, %s196
    %s214 = sphi 0, %s214
    %s216 = sphi 0, %s214
    %s217 = sphi 0, %s216
    %s231 = sphi 0, %s217
    %s235 = sphi 0, %s235
    %s237 = sphi 0, %s235
    %s238 = sphi 0, %s237
    %s252 = sphi 0, %s238
    %s256 = sphi 0, %s256
    %s258 = sphi 0, %s256
    %s259 = sphi 0, %s258
    %s273 = sphi 0, %s259
    %s277 = sphi 0, %s277
    %s279 = sphi 0, %s277
    %s280 = sphi 0, %s279
    %s294 = sphi 0, %s280
    %s298 = sphi 0, %s298
    %s300 = sphi 0, %s298
    %s301 = sphi 0, %s300
    %s315 = sphi 0, %s301
    %s319 = sphi 0, %s319
    %s321 = sphi 0, %s319
    %s322 = sphi 0, %s321
    %s336 = sphi 0, %s322
    %s340 = sphi 0, %s340
    %s342 = sphi 0, %s340
    %s343 = sphi 0, %s342
    %s357 = sphi 0, %s343
    %s361 = sphi 0, %s361
    %s363 = sphi 0, %s361
    %s364 = sphi 0, %s363
    %s378 = sphi 0, %s364
    %s382 = sphi 0, %s382
    %s384 = sphi 0, %s382
    %s385 = sphi 0, %s384
    %s399 = sphi 0, %s385
    %s405 = sphi 0, %s407
    %s408 = sphi 0, %s405
    %s409 = sphi 0, %s408
    %s425 = sphi 0, %s409
  $region4: #{tpu_custom_call.1} parent=0 // loop_header_branch
    %26 = sbr.rel (%p24) target = $region8
  $region5: #{tpu_custom_call.1} parent=0 // loop_body
    %s28 = ssub.s32 %s23, 1
    %s29 = ssub.s32 %s23, 2
    %s30 = sadd.s32 %s23, 1
    %s31 = ssub.s32 %s23, %s30
    %p32 = scmp.eq.s32.totalorder %s31, 0
    %s34 = sadd.s32 %s33, 1
    %s35 = scalar_select %p32, %s33, %s34
    %p38 = pneg %p32
    %p39 = scmp.eq.s32.totalorder %s23, 1
    %p40 = por %p38, %p39
    %p41 = scmp.ne.s32.totalorder %s33, %s36
    %p42 = scmp.eq.s32.totalorder %s23, 0
    %p43 = por %p41, %p42
    %p44 = scmp.ne.s32.totalorder %s33, %s36
    %p45 = scmp.eq.s32.totalorder %s28, 1
    %p46 = por %p44, %p45
    %p47 = scmp.ne.s32.totalorder %s36, %s37
    %p48 = scmp.eq.s32.totalorder %s28, 0
    %p49 = por %p47, %p48
    %p50 = scmp.ne.s32.totalorder %s36, %s37
    %p51 = scmp.eq.s32.totalorder %s29, 1
    %p52 = por %p50, %p51
    %p54 = scmp.ne.s32.totalorder %s37, %s53
    %p55 = scmp.eq.s32.totalorder %s29, 0
    %p56 = por %p54, %p55
    %s57 = ssub.s32 %s23, %s30
    %p58 = scmp.eq.s32.totalorder %s57, 0
    %s60 = sadd.s32 %s59, 1
    %s61 = scalar_select %p58, %s59, %s60
    %p64 = pneg %p58
    %p65 = scmp.eq.s32.totalorder %s23, 1
    %p66 = por %p64, %p65
    %p67 = scmp.ne.s32.totalorder %s59, %s62
    %p68 = scmp.eq.s32.totalorder %s23, 0
    %p69 = por %p67, %p68
    %p70 = scmp.ne.s32.totalorder %s59, %s62
    %p71 = scmp.eq.s32.totalorder %s28, 1
    %p72 = por %p70, %p71
    %p73 = scmp.ne.s32.totalorder %s62, %s63
    %p74 = scmp.eq.s32.totalorder %s28, 0
    %p75 = por %p73, %p74
    %p76 = scmp.ne.s32.totalorder %s62, %s63
    %p77 = scmp.eq.s32.totalorder %s29, 1
    %p78 = por %p76, %p77
    %p80 = scmp.ne.s32.totalorder %s63, %s79
    %p81 = scmp.eq.s32.totalorder %s29, 0
    %p82 = por %p80, %p81
    %s83 = ssub.s32 %s23, %s30
    %p84 = scmp.eq.s32.totalorder %s83, 0
    %s86 = sadd.s32 %s85, 1
    %s87 = scalar_select %p84, %s85, %s86
    %p90 = pneg %p84
    %p91 = scmp.eq.s32.totalorder %s23, 1
    %p92 = por %p90, %p91
    %p93 = scmp.ne.s32.totalorder %s85, %s88
    %p94 = scmp.eq.s32.totalorder %s23, 0
    %p95 = por %p93, %p94
    %p96 = scmp.ne.s32.totalorder %s85, %s88
    %p97 = scmp.eq.s32.totalorder %s28, 1
    %p98 = por %p96, %p97
    %p99 = scmp.ne.s32.totalorder %s88, %s89
    %p100 = scmp.eq.s32.totalorder %s28, 0
    %p101 = por %p99, %p100
    %p102 = scmp.ne.s32.totalorder %s88, %s89
    %p103 = scmp.eq.s32.totalorder %s29, 1
    %p104 = por %p102, %p103
    %p106 = scmp.ne.s32.totalorder %s89, %s105
    %p107 = scmp.eq.s32.totalorder %s29, 0
    %p108 = por %p106, %p107
    %s110 = sadd.s32 %s109, 1
    %p113 = scmp.eq.s32.totalorder %s23, 1
    %p114 = scmp.ne.s32.totalorder %s109, %s111
    %p115 = scmp.eq.s32.totalorder %s23, 0
    %p116 = por %p114, %p115
    %p117 = scmp.ne.s32.totalorder %s109, %s111
    %p118 = scmp.eq.s32.totalorder %s28, 1
    %p119 = por %p117, %p118
    %p120 = scmp.ne.s32.totalorder %s111, %s112
    %p121 = scmp.eq.s32.totalorder %s28, 0
    %p122 = por %p120, %p121
    %p123 = scmp.ne.s32.totalorder %s111, %s112
    %p124 = scmp.eq.s32.totalorder %s29, 1
    %p125 = por %p123, %p124
    %p127 = scmp.ne.s32.totalorder %s112, %s126
    %p128 = scmp.eq.s32.totalorder %s29, 0
    %p129 = por %p127, %p128
    %s131 = sadd.s32 %s130, 1
    %p134 = scmp.eq.s32.totalorder %s23, 1
    %p135 = scmp.ne.s32.totalorder %s130, %s132
    %p136 = scmp.eq.s32.totalorder %s23, 0
    %p137 = por %p135, %p136
    %p138 = scmp.ne.s32.totalorder %s130, %s132
    %p139 = scmp.eq.s32.totalorder %s28, 1
    %p140 = por %p138, %p139
    %p141 = scmp.ne.s32.totalorder %s132, %s133
    %p142 = scmp.eq.s32.totalorder %s28, 0
    %p143 = por %p141, %p142
    %p144 = scmp.ne.s32.totalorder %s132, %s133
    %p145 = scmp.eq.s32.totalorder %s29, 1
    %p146 = por %p144, %p145
    %p148 = scmp.ne.s32.totalorder %s133, %s147
    %p149 = scmp.eq.s32.totalorder %s29, 0
    %p150 = por %p148, %p149
    %s152 = sadd.s32 %s151, 1
    %p155 = scmp.eq.s32.totalorder %s23, 1
    %p156 = scmp.ne.s32.totalorder %s151, %s153
    %p157 = scmp.eq.s32.totalorder %s23, 0
    %p158 = por %p156, %p157
    %p159 = scmp.ne.s32.totalorder %s151, %s153
    %p160 = scmp.eq.s32.totalorder %s28, 1
    %p161 = por %p159, %p160
    %p162 = scmp.ne.s32.totalorder %s153, %s154
    %p163 = scmp.eq.s32.totalorder %s28, 0
    %p164 = por %p162, %p163
    %p165 = scmp.ne.s32.totalorder %s153, %s154
    %p166 = scmp.eq.s32.totalorder %s29, 1
    %p167 = por %p165, %p166
    %p169 = scmp.ne.s32.totalorder %s154, %s168
    %p170 = scmp.eq.s32.totalorder %s29, 0
    %p171 = por %p169, %p170
    %s173 = sadd.s32 %s172, 1
    %p176 = scmp.eq.s32.totalorder %s23, 1
    %p177 = scmp.ne.s32.totalorder %s172, %s174
    %p178 = scmp.eq.s32.totalorder %s23, 0
    %p179 = por %p177, %p178
    %p180 = scmp.ne.s32.totalorder %s172, %s174
    %p181 = scmp.eq.s32.totalorder %s28, 1
    %p182 = por %p180, %p181
    %p183 = scmp.ne.s32.totalorder %s174, %s175
    %p184 = scmp.eq.s32.totalorder %s28, 0
    %p185 = por %p183, %p184
    %p186 = scmp.ne.s32.totalorder %s174, %s175
    %p187 = scmp.eq.s32.totalorder %s29, 1
    %p188 = por %p186, %p187
    %p190 = scmp.ne.s32.totalorder %s175, %s189
    %p191 = scmp.eq.s32.totalorder %s29, 0
    %p192 = por %p190, %p191
    %s194 = sadd.s32 %s193, 1
    %p197 = scmp.eq.s32.totalorder %s23, 1
    %p198 = scmp.ne.s32.totalorder %s193, %s195
    %p199 = scmp.eq.s32.totalorder %s23, 0
    %p200 = por %p198, %p199
    %p201 = scmp.ne.s32.totalorder %s193, %s195
    %p202 = scmp.eq.s32.totalorder %s28, 1
    %p203 = por %p201, %p202
    %p204 = scmp.ne.s32.totalorder %s195, %s196
    %p205 = scmp.eq.s32.totalorder %s28, 0
    %p206 = por %p204, %p205
    %p207 = scmp.ne.s32.totalorder %s195, %s196
    %p208 = scmp.eq.s32.totalorder %s29, 1
    %p209 = por %p207, %p208
    %p211 = scmp.ne.s32.totalorder %s196, %s210
    %p212 = scmp.eq.s32.totalorder %s29, 0
    %p213 = por %p211, %p212
    %s215 = sadd.s32 %s214, 1
    %p218 = scmp.eq.s32.totalorder %s23, 1
    %p219 = scmp.ne.s32.totalorder %s214, %s216
    %p220 = scmp.eq.s32.totalorder %s23, 0
    %p221 = por %p219, %p220
    %p222 = scmp.ne.s32.totalorder %s214, %s216
    %p223 = scmp.eq.s32.totalorder %s28, 1
    %p224 = por %p222, %p223
    %p225 = scmp.ne.s32.totalorder %s216, %s217
    %p226 = scmp.eq.s32.totalorder %s28, 0
    %p227 = por %p225, %p226
    %p228 = scmp.ne.s32.totalorder %s216, %s217
    %p229 = scmp.eq.s32.totalorder %s29, 1
    %p230 = por %p228, %p229
    %p232 = scmp.ne.s32.totalorder %s217, %s231
    %p233 = scmp.eq.s32.totalorder %s29, 0
    %p234 = por %p232, %p233
    %s236 = sadd.s32 %s235, 1
    %p239 = scmp.eq.s32.totalorder %s23, 1
    %p240 = scmp.ne.s32.totalorder %s235, %s237
    %p241 = scmp.eq.s32.totalorder %s23, 0
    %p242 = por %p240, %p241
    %p243 = scmp.ne.s32.totalorder %s235, %s237
    %p244 = scmp.eq.s32.totalorder %s28, 1
    %p245 = por %p243, %p244
    %p246 = scmp.ne.s32.totalorder %s237, %s238
    %p247 = scmp.eq.s32.totalorder %s28, 0
    %p248 = por %p246, %p247
    %p249 = scmp.ne.s32.totalorder %s237, %s238
    %p250 = scmp.eq.s32.totalorder %s29, 1
    %p251 = por %p249, %p250
    %p253 = scmp.ne.s32.totalorder %s238, %s252
    %p254 = scmp.eq.s32.totalorder %s29, 0
    %p255 = por %p253, %p254
    %s257 = sadd.s32 %s256, 1
    %p260 = scmp.eq.s32.totalorder %s23, 1
    %p261 = scmp.ne.s32.totalorder %s256, %s258
    %p262 = scmp.eq.s32.totalorder %s23, 0
    %p263 = por %p261, %p262
    %p264 = scmp.ne.s32.totalorder %s256, %s258
    %p265 = scmp.eq.s32.totalorder %s28, 1
    %p266 = por %p264, %p265
    %p267 = scmp.ne.s32.totalorder %s258, %s259
    %p268 = scmp.eq.s32.totalorder %s28, 0
    %p269 = por %p267, %p268
    %p270 = scmp.ne.s32.totalorder %s258, %s259
    %p271 = scmp.eq.s32.totalorder %s29, 1
    %p272 = por %p270, %p271
    %p274 = scmp.ne.s32.totalorder %s259, %s273
    %p275 = scmp.eq.s32.totalorder %s29, 0
    %p276 = por %p274, %p275
    %s278 = sadd.s32 %s277, 1
    %p281 = scmp.eq.s32.totalorder %s23, 1
    %p282 = scmp.ne.s32.totalorder %s277, %s279
    %p283 = scmp.eq.s32.totalorder %s23, 0
    %p284 = por %p282, %p283
    %p285 = scmp.ne.s32.totalorder %s277, %s279
    %p286 = scmp.eq.s32.totalorder %s28, 1
    %p287 = por %p285, %p286
    %p288 = scmp.ne.s32.totalorder %s279, %s280
    %p289 = scmp.eq.s32.totalorder %s28, 0
    %p290 = por %p288, %p289
    %p291 = scmp.ne.s32.totalorder %s279, %s280
    %p292 = scmp.eq.s32.totalorder %s29, 1
    %p293 = por %p291, %p292
    %p295 = scmp.ne.s32.totalorder %s280, %s294
    %p296 = scmp.eq.s32.totalorder %s29, 0
    %p297 = por %p295, %p296
    %s299 = sadd.s32 %s298, 1
    %p302 = scmp.eq.s32.totalorder %s23, 1
    %p303 = scmp.ne.s32.totalorder %s298, %s300
    %p304 = scmp.eq.s32.totalorder %s23, 0
    %p305 = por %p303, %p304
    %p306 = scmp.ne.s32.totalorder %s298, %s300
    %p307 = scmp.eq.s32.totalorder %s28, 1
    %p308 = por %p306, %p307
    %p309 = scmp.ne.s32.totalorder %s300, %s301
    %p310 = scmp.eq.s32.totalorder %s28, 0
    %p311 = por %p309, %p310
    %p312 = scmp.ne.s32.totalorder %s300, %s301
    %p313 = scmp.eq.s32.totalorder %s29, 1
    %p314 = por %p312, %p313
    %p316 = scmp.ne.s32.totalorder %s301, %s315
    %p317 = scmp.eq.s32.totalorder %s29, 0
    %p318 = por %p316, %p317
    %s320 = sadd.s32 %s319, 1
    %p323 = scmp.eq.s32.totalorder %s23, 1
    %p324 = scmp.ne.s32.totalorder %s319, %s321
    %p325 = scmp.eq.s32.totalorder %s23, 0
    %p326 = por %p324, %p325
    %p327 = scmp.ne.s32.totalorder %s319, %s321
    %p328 = scmp.eq.s32.totalorder %s28, 1
    %p329 = por %p327, %p328
    %p330 = scmp.ne.s32.totalorder %s321, %s322
    %p331 = scmp.eq.s32.totalorder %s28, 0
    %p332 = por %p330, %p331
    %p333 = scmp.ne.s32.totalorder %s321, %s322
    %p334 = scmp.eq.s32.totalorder %s29, 1
    %p335 = por %p333, %p334
    %p337 = scmp.ne.s32.totalorder %s322, %s336
    %p338 = scmp.eq.s32.totalorder %s29, 0
    %p339 = por %p337, %p338
    %s341 = sadd.s32 %s340, 1
    %p344 = scmp.eq.s32.totalorder %s23, 1
    %p345 = scmp.ne.s32.totalorder %s340, %s342
    %p346 = scmp.eq.s32.totalorder %s23, 0
    %p347 = por %p345, %p346
    %p348 = scmp.ne.s32.totalorder %s340, %s342
    %p349 = scmp.eq.s32.totalorder %s28, 1
    %p350 = por %p348, %p349
    %p351 = scmp.ne.s32.totalorder %s342, %s343
    %p352 = scmp.eq.s32.totalorder %s28, 0
    %p353 = por %p351, %p352
    %p354 = scmp.ne.s32.totalorder %s342, %s343
    %p355 = scmp.eq.s32.totalorder %s29, 1
    %p356 = por %p354, %p355
    %p358 = scmp.ne.s32.totalorder %s343, %s357
    %p359 = scmp.eq.s32.totalorder %s29, 0
    %p360 = por %p358, %p359
    %s362 = sadd.s32 %s361, 1
    %p365 = scmp.eq.s32.totalorder %s23, 1
    %p366 = scmp.ne.s32.totalorder %s361, %s363
    %p367 = scmp.eq.s32.totalorder %s23, 0
    %p368 = por %p366, %p367
    %p369 = scmp.ne.s32.totalorder %s361, %s363
    %p370 = scmp.eq.s32.totalorder %s28, 1
    %p371 = por %p369, %p370
    %p372 = scmp.ne.s32.totalorder %s363, %s364
    %p373 = scmp.eq.s32.totalorder %s28, 0
    %p374 = por %p372, %p373
    %p375 = scmp.ne.s32.totalorder %s363, %s364
    %p376 = scmp.eq.s32.totalorder %s29, 1
    %p377 = por %p375, %p376
    %p379 = scmp.ne.s32.totalorder %s364, %s378
    %p380 = scmp.eq.s32.totalorder %s29, 0
    %p381 = por %p379, %p380
    %s383 = sadd.s32 %s382, 1
    %p386 = scmp.eq.s32.totalorder %s23, 1
    %p387 = scmp.ne.s32.totalorder %s382, %s384
    %p388 = scmp.eq.s32.totalorder %s23, 0
    %p389 = por %p387, %p388
    %p390 = scmp.ne.s32.totalorder %s382, %s384
    %p391 = scmp.eq.s32.totalorder %s28, 1
    %p392 = por %p390, %p391
    %p393 = scmp.ne.s32.totalorder %s384, %s385
    %p394 = scmp.eq.s32.totalorder %s28, 0
    %p395 = por %p393, %p394
    %p396 = scmp.ne.s32.totalorder %s384, %s385
    %p397 = scmp.eq.s32.totalorder %s29, 1
    %p398 = por %p396, %p397
    %p400 = scmp.ne.s32.totalorder %s385, %s399
    %p401 = scmp.eq.s32.totalorder %s29, 0
    %p402 = por %p400, %p401
    %s403 = ssub.s32 %s23, %s30
    %p404 = scmp.eq.s32.totalorder %s403, 0
    %s406 = sadd.s32 %s405, 1
    %s407 = scalar_select %p404, %s405, %s406
    %p410 = pneg %p404
    %p411 = scmp.eq.s32.totalorder %s23, 1
    %p412 = por %p410, %p411
    %p413 = scmp.ne.s32.totalorder %s405, %s408
    %p414 = scmp.eq.s32.totalorder %s23, 0
    %p415 = por %p413, %p414
    %p416 = scmp.ne.s32.totalorder %s405, %s408
    %p417 = scmp.eq.s32.totalorder %s28, 1
    %p418 = por %p416, %p417
    %p419 = scmp.ne.s32.totalorder %s408, %s409
    %p420 = scmp.eq.s32.totalorder %s28, 0
    %p421 = por %p419, %p420
    %p422 = scmp.ne.s32.totalorder %s408, %s409
    %p423 = scmp.eq.s32.totalorder %s29, 1
    %p424 = por %p422, %p423
    %p426 = scmp.ne.s32.totalorder %s409, %s425
    %p427 = scmp.eq.s32.totalorder %s29, 0
    %p428 = por %p426, %p427
    %p429 = scmp.le.s32.totalorder 1, %s23
    %p430 = scmp.lt.s32.totalorder %s23, 3
    %p431 = pnand %p429, %p430
    %p432 = pneg %p431
    // Predicated region
    $region9: #{tpu_custom_call.1} parent=5 // pred_check
      _
    $region10: #{tpu_custom_call.1} parent=5 // pred_check_branch
      %434 = sbr.rel (%p431) target = $region12
    $region11: #{tpu_custom_call.1} parent=5 // pred_region
      %s435 = ssub.s32 %s23, 1
      // Predicated region
      $region13: #{tpu_custom_call.1} parent=11 // pred_check
        %p436 = pneg %p122
      $region14: #{tpu_custom_call.1} parent=11 // pred_check_branch
        %438 = sbr.rel (%p436) target = $region16
      $region15: #{tpu_custom_call.1} parent=11 // pred_region
        _
      $region16: #{tpu_custom_call.1} parent=11 // pred_fallthru
        _
      // Predicated region
      $region17: #{tpu_custom_call.1} parent=11 // pred_check
        %p439 = pneg %p143
      $region18: #{tpu_custom_call.1} parent=11 // pred_check_branch
        %441 = sbr.rel (%p439) target = $region20
      $region19: #{tpu_custom_call.1} parent=11 // pred_region
        _
      $region20: #{tpu_custom_call.1} parent=11 // pred_fallthru
        _
      // Predicated region
      $region21: #{tpu_custom_call.1} parent=11 // pred_check
        %p442 = pneg %p164
      $region22: #{tpu_custom_call.1} parent=11 // pred_check_branch
        %444 = sbr.rel (%p442) target = $region24
      $region23: #{tpu_custom_call.1} parent=11 // pred_region
        _
      $region24: #{tpu_custom_call.1} parent=11 // pred_fallthru
        _
      // Predicated region
      $region25: #{tpu_custom_call.1} parent=11 // pred_check
        %p445 = pneg %p185
      $region26: #{tpu_custom_call.1} parent=11 // pred_check_branch
        %447 = sbr.rel (%p445) target = $region28
      $region27: #{tpu_custom_call.1} parent=11 // pred_region
        _
      $region28: #{tpu_custom_call.1} parent=11 // pred_fallthru
        _
      // Predicated region
      $region29: #{tpu_custom_call.1} parent=11 // pred_check
        %p448 = pneg %p206
      $region30: #{tpu_custom_call.1} parent=11 // pred_check_branch
        %450 = sbr.rel (%p448) target = $region32
      $region31: #{tpu_custom_call.1} parent=11 // pred_region
        _
      $region32: #{tpu_custom_call.1} parent=11 // pred_fallthru
        _
      // Predicated region
      $region33: #{tpu_custom_call.1} parent=11 // pred_check
        %p451 = pneg %p227
      $region34: #{tpu_custom_call.1} parent=11 // pred_check_branch
        %453 = sbr.rel (%p451) target = $region36
      $region35: #{tpu_custom_call.1} parent=11 // pred_region
        _
      $region36: #{tpu_custom_call.1} parent=11 // pred_fallthru
        _
      // Predicated region
      $region37: #{tpu_custom_call.1} parent=11 // pred_check
        %p454 = pneg %p248
      $region38: #{tpu_custom_call.1} parent=11 // pred_check_branch
        %456 = sbr.rel (%p454) target = $region40
      $region39: #{tpu_custom_call.1} parent=11 // pred_region
        _
      $region40: #{tpu_custom_call.1} parent=11 // pred_fallthru
        _
      // Predicated region
      $region41: #{tpu_custom_call.1} parent=11 // pred_check
        %p457 = pneg %p269
      $region42: #{tpu_custom_call.1} parent=11 // pred_check_branch
        %459 = sbr.rel (%p457) target = $region44
      $region43: #{tpu_custom_call.1} parent=11 // pred_region
        _
      $region44: #{tpu_custom_call.1} parent=11 // pred_fallthru
        _
      // Predicated region
      $region45: #{tpu_custom_call.1} parent=11 // pred_check
        %p460 = pneg %p290
      $region46: #{tpu_custom_call.1} parent=11 // pred_check_branch
        %462 = sbr.rel (%p460) target = $region48
      $region47: #{tpu_custom_call.1} parent=11 // pred_region
        _
      $region48: #{tpu_custom_call.1} parent=11 // pred_fallthru
        _
      // Predicated region
      $region49: #{tpu_custom_call.1} parent=11 // pred_check
        %p463 = pneg %p311
      $region50: #{tpu_custom_call.1} parent=11 // pred_check_branch
        %465 = sbr.rel (%p463) target = $region52
      $region51: #{tpu_custom_call.1} parent=11 // pred_region
        _
      $region52: #{tpu_custom_call.1} parent=11 // pred_fallthru
        _
      // Predicated region
      $region53: #{tpu_custom_call.1} parent=11 // pred_check
        %p466 = pneg %p332
      $region54: #{tpu_custom_call.1} parent=11 // pred_check_branch
        %468 = sbr.rel (%p466) target = $region56
      $region55: #{tpu_custom_call.1} parent=11 // pred_region
        _
      $region56: #{tpu_custom_call.1} parent=11 // pred_fallthru
        _
      // Predicated region
      $region57: #{tpu_custom_call.1} parent=11 // pred_check
        %p469 = pneg %p353
      $region58: #{tpu_custom_call.1} parent=11 // pred_check_branch
        %471 = sbr.rel (%p469) target = $region60
      $region59: #{tpu_custom_call.1} parent=11 // pred_region
        _
      $region60: #{tpu_custom_call.1} parent=11 // pred_fallthru
        _
      // Predicated region
      $region61: #{tpu_custom_call.1} parent=11 // pred_check
        %p472 = pneg %p374
      $region62: #{tpu_custom_call.1} parent=11 // pred_check_branch
        %474 = sbr.rel (%p472) target = $region64
      $region63: #{tpu_custom_call.1} parent=11 // pred_region
        _
      $region64: #{tpu_custom_call.1} parent=11 // pred_fallthru
        _
      // Predicated region
      $region65: #{tpu_custom_call.1} parent=11 // pred_check
        %p475 = pneg %p395
      $region66: #{tpu_custom_call.1} parent=11 // pred_check_branch
        %477 = sbr.rel (%p475) target = $region68
      $region67: #{tpu_custom_call.1} parent=11 // pred_region
        _
      $region68: #{tpu_custom_call.1} parent=11 // pred_fallthru
        _
    $region12: #{tpu_custom_call.1} parent=5 // pred_fallthru
      _
    %p478 = scmp.lt.s32.totalorder %s23, 2
    // Predicated region
    $region69: #{tpu_custom_call.1} parent=5 // pred_check
      %p479 = pneg %p478
    $region70: #{tpu_custom_call.1} parent=5 // pred_check_branch
      %481 = sbr.rel (%p479) target = $region72
    $region71: #{tpu_custom_call.1} parent=5 // pred_region
      // Predicated region
      $region73: #{tpu_custom_call.1} parent=71 // pred_check
        %p482 = pneg %p43
      $region74: #{tpu_custom_call.1} parent=71 // pred_check_branch
        %484 = sbr.rel (%p482) target = $region76
      $region75: #{tpu_custom_call.1} parent=71 // pred_region
        %s485 = smul.u32 16, %s23
        %p486 = scmp.lt.s32.totalorder %s485, 31
        %s487 = scalar_select %p486, %s485, 31
        %s488 = smul.addr %s487, 8
        %s489 = scalar_lea.vmem %s0, %s488
        %s490 = smul.u32 16, %s23
      $region76: #{tpu_custom_call.1} parent=71 // pred_fallthru
        _
      // Predicated region
      $region77: #{tpu_custom_call.1} parent=71 // pred_check
        %p491 = pneg %p69
      $region78: #{tpu_custom_call.1} parent=71 // pred_check_branch
        %493 = sbr.rel (%p491) target = $region80
      $region79: #{tpu_custom_call.1} parent=71 // pred_region
        %s494 = smul.u32 16, %s23
        %p495 = scmp.lt.s32.totalorder %s494, 31
        %s496 = scalar_select %p495, %s494, 31
        %s497 = smul.addr %s496, 8
        %s498 = scalar_lea.vmem %s1, %s497
        %s499 = smul.u32 16, %s23
      $region80: #{tpu_custom_call.1} parent=71 // pred_fallthru
        _
      // Predicated region
      $region81: #{tpu_custom_call.1} parent=71 // pred_check
        %p500 = pneg %p95
      $region82: #{tpu_custom_call.1} parent=71 // pred_check_branch
        %502 = sbr.rel (%p500) target = $region84
      $region83: #{tpu_custom_call.1} parent=71 // pred_region
        %s503 = smul.u32 16, %s23
        %p504 = scmp.lt.s32.totalorder %s503, 31
        %s505 = scalar_select %p504, %s503, 31
        %s506 = smul.addr %s505, 4
        %s507 = smul.addr %s506, 8
        %s508 = scalar_lea.vmem %s2, %s507
        %s509 = smul.u32 16, %s23
      $region84: #{tpu_custom_call.1} parent=71 // pred_fallthru
        _
    $region72: #{tpu_custom_call.1} parent=5 // pred_fallthru
      _
    %p510 = scmp.le.s32.totalorder 1, %s23
    %p511 = scmp.lt.s32.totalorder %s23, 3
    %p512 = pnand %p510, %p511
    %p513 = pneg %p512
    // Predicated region
    $region85: #{tpu_custom_call.1} parent=5 // pred_check
      _
    $region86: #{tpu_custom_call.1} parent=5 // pred_check_branch
      %515 = sbr.rel (%p512) target = $region88
    $region87: #{tpu_custom_call.1} parent=5 // pred_region
      %s516 = ssub.s32 %s23, 1
      %s517 = smul.u32 16, %s28
      %p518 = scmp.lt.s32.totalorder %s517, 31
      %s519 = scalar_select %p518, %s517, 31
      %s520 = smul.addr %s519, 8
      %s521 = scalar_lea.vmem %s0, %s520
      %p522 = pneg %p49
      %p523 = pneg %p46
      %s524 = smul.u32 16, %s28
      %p525 = scmp.lt.s32.totalorder %s524, 31
      %s526 = scalar_select %p525, %s524, 31
      %s527 = smul.addr %s526, 8
      %s528 = scalar_lea.vmem %s1, %s527
      %p529 = pneg %p75
      %p530 = pneg %p72
      %s531 = smul.u32 16, %s28
      %p532 = scmp.lt.s32.totalorder %s531, 31
      %s533 = scalar_select %p532, %s531, 31
      %s534 = smul.addr %s533, 4
      %s535 = smul.addr %s534, 8
      %s536 = scalar_lea.vmem %s2, %s535
      %p537 = pneg %p101
      %p538 = pneg %p98
      %p539 = pneg %p122
      %p540 = pneg %p119
      %p541 = pneg %p143
      %p542 = pneg %p140
      %p543 = pneg %p164
      %p544 = pneg %p161
      %p545 = pneg %p185
      %p546 = pneg %p182
      %p547 = pneg %p206
      %p548 = pneg %p203
      %p549 = pneg %p227
      %p550 = pneg %p224
      %p551 = pneg %p248
      %p552 = pneg %p245
      %p553 = pneg %p269
      %p554 = pneg %p266
      %p555 = pneg %p290
      %p556 = pneg %p287
      %p557 = pneg %p311
      %p558 = pneg %p308
      %p559 = pneg %p332
      %p560 = pneg %p329
      %p561 = pneg %p353
      %p562 = pneg %p350
      %p563 = pneg %p374
      %p564 = pneg %p371
      %p565 = pneg %p395
      %p566 = pneg %p392
      %p567 = pneg %p421
      %p568 = pneg %p418
      %s569 = smul.u32 16, %s28
      %p570 = scmp.lt.s32.totalorder %s569, 31
      %s571 = scalar_select %p570, %s569, 31
      %s572 = smul.addr %s571, 8
      %s573 = scalar_lea.vmem %s17, %s572
      %s574 = smul.u32 16, %s28
      %p575 = scmp.lt.s32.totalorder %s574, 31
      %s576 = scalar_select %p575, %s574, 31
      %s577 = smul.addr %s576, 8
      %s578 = scalar_lea.vmem %s0, %s577
      %s579 = smul.u32 16, %s28
      %s580 = smul.u32 16, %s28
      %p581 = scmp.lt.s32.totalorder %s580, 31
      %s582 = scalar_select %p581, %s580, 31
      %s583 = smul.addr %s582, 8
      %s584 = scalar_lea.vmem %s1, %s583
      %s585 = smul.u32 16, %s28
      %s586 = smul.u32 16, %s28
      %p587 = scmp.lt.s32.totalorder %s586, 31
      %s588 = scalar_select %p587, %s586, 31
      %s589 = smul.addr %s588, 4
      %s590 = smul.addr %s589, 8
      %s591 = scalar_lea.vmem %s2, %s590
      %s592 = smul.u32 16, %s28
      %s593 = smul.u32 16, %s28
      %p594 = scmp.lt.s32.totalorder %s593, 31
      %s595 = scalar_select %p594, %s593, 31
      %s596 = smul.addr %s595, 8
      %s597 = scalar_lea.vmem %s17, %s596
      %s598 = smul.u32 16, %s28
      %v599 = vld [vmem:[%s578] sm:$0xff]
      %v600 = vld [vmem:[%s578 + $0x8] sm:$0xff]
      %v601 = vld [vmem:[%s578 + $0x10] sm:$0xff]
      %v602 = vld [vmem:[%s578 + $0x18] sm:$0xff]
      %v603 = vld [vmem:[%s578 + $0x20] sm:$0xff]
      %v604 = vld [vmem:[%s578 + $0x28] sm:$0xff]
      %v605 = vld [vmem:[%s578 + $0x30] sm:$0xff]
      %v606 = vld [vmem:[%s578 + $0x38] sm:$0xff]
      %v607 = vld [vmem:[%s578 + $0x40] sm:$0xff]
      %v608 = vld [vmem:[%s578 + $0x48] sm:$0xff]
      %v609 = vld [vmem:[%s578 + $0x50] sm:$0xff]
      %v610 = vld [vmem:[%s578 + $0x58] sm:$0xff]
      %v611 = vld [vmem:[%s578 + $0x60] sm:$0xff]
      %v612 = vld [vmem:[%s578 + $0x68] sm:$0xff]
      %v613 = vld [vmem:[%s578 + $0x70] sm:$0xff]
      %v614 = vld [vmem:[%s578 + $0x78] sm:$0xff]
      %v615 = vld [vmem:[%s3] sm:$0xff]
      %v616 = vld [vmem:[%s3 + $0x8] sm:$0xff]
      %v617 = vld [vmem:[%s4] sm:$0x1]
      %v619 = vlaneseq
      %v620 = vshrl.u32 %v619, 7
      %v621 = vsub.s32 0, %v620
      %v622 = vrot.slane %v617, %v621
      %vm624 = vcmask 130048
      %v626 = vsel %vm624, %v599, 0
      %v629 = vsel %vm624, %v600, 0
      %v632 = vsel %vm624, %v601, 0
      %v635 = vsel %vm624, %v602, 0
      %v638 = vsel %vm624, %v603, 0
      %v641 = vsel %vm624, %v604, 0
      %v644 = vsel %vm624, %v605, 0
      %v647 = vsel %vm624, %v606, 0
      %v650 = vsel %vm624, %v607, 0
      %v653 = vsel %vm624, %v608, 0
      %v656 = vsel %vm624, %v609, 0
      %v659 = vsel %vm624, %v610, 0
      %v662 = vsel %vm624, %v611, 0
      %v665 = vsel %vm624, %v612, 0
      %v668 = vsel %vm624, %v613, 0
      %v671 = vsel %vm624, %v614, 0
      %673 = vmatprep.subr.mxu0 0.0
      %674 = vmatpush1.msra.mxu0 0.0
      %675 = vmatprep.subr.mxu0 0.0
      %676 = vmatpush1.msra.mxu0 0.0
      %677 = vmatprep.subr.mxu0 0.0
      %678 = vmatpush1.msra.mxu0 0.0
      %679 = vmatprep.subr.mxu0 0.0
      %680 = vmatpush1.msra.mxu0 0.0
      %681 = vmatprep.subr.mxu0 0.0
      %682 = vmatpush1.msra.mxu0 0.0
      %683 = vmatprep.subr.mxu0 0.0
      %684 = vmatpush1.msra.mxu0 0.0
      %685 = vmatprep.subr.mxu0 0.0
      %686 = vmatpush1.msra.mxu0 0.0
      %687 = vmatprep.subr.mxu0 0.0
      %688 = vmatpush1.msra.mxu0 0.0
      %689 = vmatprep.subr.mxu0 0.0
      %690 = vmatpush1.msra.mxu0 0.0
      %691 = vmatprep.subr.mxu0 0.0
      %692 = vmatpush1.msra.mxu0 0.0
      %693 = vmatprep.subr.mxu0 0.0
      %694 = vmatpush1.msra.mxu0 0.0
      %695 = vmatprep.subr.mxu0 0.0
      %696 = vmatpush1.msra.mxu0 0.0
      %697 = vmatprep.subr.mxu0 0.0
      %698 = vmatpush1.msra.mxu0 0.0
      %699 = vmatprep.subr.mxu0 0.0
      %700 = vmatpush1.msra.mxu0 0.0
      %701 = vmatprep.subr.mxu0 0.0
      %702 = vmatpush1.msra.mxu0 %v616
      %703 = vmatprep.subr.mxu0 0.0
      %704 = vmatpush1.msra.mxu0 %v615
      %705 = vmatprep.subr.mxu0 0.0
      %706 = vmatpush2.msra.mxu0 0.0
      %707 = vmatprep.subr.mxu0 0.0
      %708 = vmatpush2.msra.mxu0 0.0
      %709 = vmatprep.subr.mxu0 0.0
      %710 = vmatpush2.msra.mxu0 0.0
      %711 = vmatprep.subr.mxu0 0.0
      %712 = vmatpush2.msra.mxu0 0.0
      %713 = vmatprep.subr.mxu0 0.0
      %714 = vmatpush2.msra.mxu0 0.0
      %715 = vmatprep.subr.mxu0 0.0
      %716 = vmatpush2.msra.mxu0 0.0
      %717 = vmatprep.subr.mxu0 0.0
      %718 = vmatpush2.msra.mxu0 0.0
      %719 = vmatprep.subr.mxu0 0.0
      %720 = vmatpush2.msra.mxu0 0.0
      %721 = vmatprep.subr.mxu0 0.0
      %722 = vmatpush2.msra.mxu0 0.0
      %723 = vmatprep.subr.mxu0 0.0
      %724 = vmatpush2.msra.mxu0 0.0
      %725 = vmatprep.subr.mxu0 0.0
      %726 = vmatpush2.msra.mxu0 0.0
      %727 = vmatprep.subr.mxu0 0.0
      %728 = vmatpush2.msra.mxu0 0.0
      %729 = vmatprep.subr.mxu0 0.0
      %730 = vmatpush2.msra.mxu0 0.0
      %731 = vmatprep.subr.mxu0 0.0
      %732 = vmatpush2.msra.mxu0 0.0
      %733 = vmatprep.subr.mxu0 0.0
      %734 = vmatpush2.msra.mxu0 0.0
      %735 = vmatprep.subr.mxu0 0.0
      %736 = vmatpush2.msra.mxu0 0.0
      %737 = vmatprep.mubr.f32.mxu0 0.0
      %738 = vmatmul.mubr.f32.gmra.mxu0 %v626
      %v739 = vpop.f32.mrf.mxu0
      %v740 = vadd.f32 %v622, %v739
      %v741 = vpop.f32.mrf.mxu0
      %742 = vmatprep.mubr.f32.mxu0 0.0
      %743 = vmatmul.mubr.f32.gmra.mxu0 %v629
      %v744 = vpop.f32.mrf.mxu0
      %v745 = vadd.f32 %v622, %v744
      %v746 = vpop.f32.mrf.mxu0
      %747 = vmatprep.mubr.f32.mxu0 0.0
      %748 = vmatmul.mubr.f32.gmra.mxu0 %v632
      %v749 = vpop.f32.mrf.mxu0
      %v750 = vadd.f32 %v622, %v749
      %v751 = vpop.f32.mrf.mxu0
      %752 = vmatprep.mubr.f32.mxu0 0.0
      %753 = vmatmul.mubr.f32.gmra.mxu0 %v635
      %v754 = vpop.f32.mrf.mxu0
      %v755 = vadd.f32 %v622, %v754
      %v756 = vpop.f32.mrf.mxu0
      %757 = vmatprep.mubr.f32.mxu0 0.0
      %758 = vmatmul.mubr.f32.gmra.mxu0 %v638
      %v759 = vpop.f32.mrf.mxu0
      %v760 = vadd.f32 %v622, %v759
      %v761 = vpop.f32.mrf.mxu0
      %762 = vmatprep.mubr.f32.mxu0 0.0
      %763 = vmatmul.mubr.f32.gmra.mxu0 %v641
      %v764 = vpop.f32.mrf.mxu0
      %v765 = vadd.f32 %v622, %v764
      %v766 = vpop.f32.mrf.mxu0
      %767 = vmatprep.mubr.f32.mxu0 0.0
      %768 = vmatmul.mubr.f32.gmra.mxu0 %v644
      %v769 = vpop.f32.mrf.mxu0
      %v770 = vadd.f32 %v622, %v769
      %v771 = vpop.f32.mrf.mxu0
      %772 = vmatprep.mubr.f32.mxu0 0.0
      %773 = vmatmul.mubr.f32.gmra.mxu0 %v647
      %v774 = vpop.f32.mrf.mxu0
      %v775 = vadd.f32 %v622, %v774
      %v776 = vpop.f32.mrf.mxu0
      %777 = vmatprep.mubr.f32.mxu0 0.0
      %778 = vmatmul.mubr.f32.gmra.mxu0 %v650
      %v779 = vpop.f32.mrf.mxu0
      %v780 = vadd.f32 %v622, %v779
      %v781 = vpop.f32.mrf.mxu0
      %782 = vmatprep.mubr.f32.mxu0 0.0
      %783 = vmatmul.mubr.f32.gmra.mxu0 %v653
      %v784 = vpop.f32.mrf.mxu0
      %v785 = vadd.f32 %v622, %v784
      %v786 = vpop.f32.mrf.mxu0
      %787 = vmatprep.mubr.f32.mxu0 0.0
      %788 = vmatmul.mubr.f32.gmra.mxu0 %v656
      %v789 = vpop.f32.mrf.mxu0
      %v790 = vadd.f32 %v622, %v789
      %v791 = vpop.f32.mrf.mxu0
      %792 = vmatprep.mubr.f32.mxu0 0.0
      %793 = vmatmul.mubr.f32.gmra.mxu0 %v659
      %v794 = vpop.f32.mrf.mxu0
      %v795 = vadd.f32 %v622, %v794
      %v796 = vpop.f32.mrf.mxu0
      %797 = vmatprep.mubr.f32.mxu0 0.0
      %798 = vmatmul.mubr.f32.gmra.mxu0 %v662
      %v799 = vpop.f32.mrf.mxu0
      %v800 = vadd.f32 %v622, %v799
      %v801 = vpop.f32.mrf.mxu0
      %802 = vmatprep.mubr.f32.mxu0 0.0
      %803 = vmatmul.mubr.f32.gmra.mxu0 %v665
      %v804 = vpop.f32.mrf.mxu0
      %v805 = vadd.f32 %v622, %v804
      %v806 = vpop.f32.mrf.mxu0
      %807 = vmatprep.mubr.f32.mxu0 0.0
      %808 = vmatmul.mubr.f32.gmra.mxu0 %v668
      %v809 = vpop.f32.mrf.mxu0
      %v810 = vadd.f32 %v622, %v809
      %v811 = vpop.f32.mrf.mxu0
      %812 = vmatprep.mubr.f32.mxu0 0.0
      %813 = vmatmul.mubr.f32.gmra.mxu0 %v671
      %v814 = vpop.f32.mrf.mxu0
      %v815 = vadd.f32 %v622, %v814
      %v816 = vpop.f32.mrf.mxu0
      %817 = vdwg.mxu0
      %v818 = vmax.f32 %v740, 0.0
      %v819 = vmax.f32 %v745, 0.0
      %v820 = vmax.f32 %v750, 0.0
      %v821 = vmax.f32 %v755, 0.0
      %v822 = vmax.f32 %v760, 0.0
      %v823 = vmax.f32 %v765, 0.0
      %v824 = vmax.f32 %v770, 0.0
      %v825 = vmax.f32 %v775, 0.0
      %v826 = vmax.f32 %v780, 0.0
      %v827 = vmax.f32 %v785, 0.0
      %v828 = vmax.f32 %v790, 0.0
      %v829 = vmax.f32 %v795, 0.0
      %v830 = vmax.f32 %v800, 0.0
      %v831 = vmax.f32 %v805, 0.0
      %v832 = vmax.f32 %v810, 0.0
      %v833 = vmax.f32 %v815, 0.0
      %v834 = vld [vmem:[%s5] sm:$0xff]
      %v835 = vld [vmem:[%s5 + $0x8] sm:$0xff]
      %v836 = vld [vmem:[%s6] sm:$0x1]
      %v838 = vlaneseq
      %v839 = vshrl.u32 %v838, 7
      %v840 = vsub.s32 0, %v839
      %v841 = vrot.slane %v836, %v840
      %v844 = vsel %vm624, %v818, 0
      %v847 = vsel %vm624, %v819, 0
      %v850 = vsel %vm624, %v820, 0
      %v853 = vsel %vm624, %v821, 0
      %v856 = vsel %vm624, %v822, 0
      %v859 = vsel %vm624, %v823, 0
      %v862 = vsel %vm624, %v824, 0
      %v865 = vsel %vm624, %v825, 0
      %v868 = vsel %vm624, %v826, 0
      %v871 = vsel %vm624, %v827, 0
      %v874 = vsel %vm624, %v828, 0
      %v877 = vsel %vm624, %v829, 0
      %v880 = vsel %vm624, %v830, 0
      %v883 = vsel %vm624, %v831, 0
      %v886 = vsel %vm624, %v832, 0
      %v889 = vsel %vm624, %v833, 0
      %891 = vmatprep.subr.mxu0 0.0
      %892 = vmatpush1.msra.mxu0 0.0
      %893 = vmatprep.subr.mxu0 0.0
      %894 = vmatpush1.msra.mxu0 0.0
      %895 = vmatprep.subr.mxu0 0.0
      %896 = vmatpush1.msra.mxu0 0.0
      %897 = vmatprep.subr.mxu0 0.0
      %898 = vmatpush1.msra.mxu0 0.0
      %899 = vmatprep.subr.mxu0 0.0
      %900 = vmatpush1.msra.mxu0 0.0
      %901 = vmatprep.subr.mxu0 0.0
      %902 = vmatpush1.msra.mxu0 0.0
      %903 = vmatprep.subr.mxu0 0.0
      %904 = vmatpush1.msra.mxu0 0.0
      %905 = vmatprep.subr.mxu0 0.0
      %906 = vmatpush1.msra.mxu0 0.0
      %907 = vmatprep.subr.mxu0 0.0
      %908 = vmatpush1.msra.mxu0 0.0
      %909 = vmatprep.subr.mxu0 0.0
      %910 = vmatpush1.msra.mxu0 0.0
      %911 = vmatprep.subr.mxu0 0.0
      %912 = vmatpush1.msra.mxu0 0.0
      %913 = vmatprep.subr.mxu0 0.0
      %914 = vmatpush1.msra.mxu0 0.0
      %915 = vmatprep.subr.mxu0 0.0
      %916 = vmatpush1.msra.mxu0 0.0
      %917 = vmatprep.subr.mxu0 0.0
      %918 = vmatpush1.msra.mxu0 0.0
      %919 = vmatprep.subr.mxu0 0.0
      %920 = vmatpush1.msra.mxu0 %v835
      %921 = vmatprep.subr.mxu0 0.0
      %922 = vmatpush1.msra.mxu0 %v834
      %923 = vmatprep.subr.mxu0 0.0
      %924 = vmatpush2.msra.mxu0 0.0
      %925 = vmatprep.subr.mxu0 0.0
      %926 = vmatpush2.msra.mxu0 0.0
      %927 = vmatprep.subr.mxu0 0.0
      %928 = vmatpush2.msra.mxu0 0.0
      %929 = vmatprep.subr.mxu0 0.0
      %930 = vmatpush2.msra.mxu0 0.0
      %931 = vmatprep.subr.mxu0 0.0
      %932 = vmatpush2.msra.mxu0 0.0
      %933 = vmatprep.subr.mxu0 0.0
      %934 = vmatpush2.msra.mxu0 0.0
      %935 = vmatprep.subr.mxu0 0.0
      %936 = vmatpush2.msra.mxu0 0.0
      %937 = vmatprep.subr.mxu0 0.0
      %938 = vmatpush2.msra.mxu0 0.0
      %939 = vmatprep.subr.mxu0 0.0
      %940 = vmatpush2.msra.mxu0 0.0
      %941 = vmatprep.subr.mxu0 0.0
      %942 = vmatpush2.msra.mxu0 0.0
      %943 = vmatprep.subr.mxu0 0.0
      %944 = vmatpush2.msra.mxu0 0.0
      %945 = vmatprep.subr.mxu0 0.0
      %946 = vmatpush2.msra.mxu0 0.0
      %947 = vmatprep.subr.mxu0 0.0
      %948 = vmatpush2.msra.mxu0 0.0
      %949 = vmatprep.subr.mxu0 0.0
      %950 = vmatpush2.msra.mxu0 0.0
      %951 = vmatprep.subr.mxu0 0.0
      %952 = vmatpush2.msra.mxu0 0.0
      %953 = vmatprep.subr.mxu0 0.0
      %954 = vmatpush2.msra.mxu0 0.0
      %955 = vmatprep.mubr.f32.mxu0 0.0
      %956 = vmatmul.mubr.f32.gmra.mxu0 %v844
      %v957 = vpop.f32.mrf.mxu0
      %v958 = vadd.f32 %v841, %v957
      %v959 = vpop.f32.mrf.mxu0
      %960 = vmatprep.mubr.f32.mxu0 0.0
      %961 = vmatmul.mubr.f32.gmra.mxu0 %v847
      %v962 = vpop.f32.mrf.mxu0
      %v963 = vadd.f32 %v841, %v962
      %v964 = vpop.f32.mrf.mxu0
      %965 = vmatprep.mubr.f32.mxu0 0.0
      %966 = vmatmul.mubr.f32.gmra.mxu0 %v850
      %v967 = vpop.f32.mrf.mxu0
      %v968 = vadd.f32 %v841, %v967
      %v969 = vpop.f32.mrf.mxu0
      %970 = vmatprep.mubr.f32.mxu0 0.0
      %971 = vmatmul.mubr.f32.gmra.mxu0 %v853
      %v972 = vpop.f32.mrf.mxu0
      %v973 = vadd.f32 %v841, %v972
      %v974 = vpop.f32.mrf.mxu0
      %975 = vmatprep.mubr.f32.mxu0 0.0
      %976 = vmatmul.mubr.f32.gmra.mxu0 %v856
      %v977 = vpop.f32.mrf.mxu0
      %v978 = vadd.f32 %v841, %v977
      %v979 = vpop.f32.mrf.mxu0
      %980 = vmatprep.mubr.f32.mxu0 0.0
      %981 = vmatmul.mubr.f32.gmra.mxu0 %v859
      %v982 = vpop.f32.mrf.mxu0
      %v983 = vadd.f32 %v841, %v982
      %v984 = vpop.f32.mrf.mxu0
      %985 = vmatprep.mubr.f32.mxu0 0.0
      %986 = vmatmul.mubr.f32.gmra.mxu0 %v862
      %v987 = vpop.f32.mrf.mxu0
      %v988 = vadd.f32 %v841, %v987
      %v989 = vpop.f32.mrf.mxu0
      %990 = vmatprep.mubr.f32.mxu0 0.0
      %991 = vmatmul.mubr.f32.gmra.mxu0 %v865
      %v992 = vpop.f32.mrf.mxu0
      %v993 = vadd.f32 %v841, %v992
      %v994 = vpop.f32.mrf.mxu0
      %995 = vmatprep.mubr.f32.mxu0 0.0
      %996 = vmatmul.mubr.f32.gmra.mxu0 %v868
      %v997 = vpop.f32.mrf.mxu0
      %v998 = vadd.f32 %v841, %v997
      %v999 = vpop.f32.mrf.mxu0
      %1000 = vmatprep.mubr.f32.mxu0 0.0
      %1001 = vmatmul.mubr.f32.gmra.mxu0 %v871
      %v1002 = vpop.f32.mrf.mxu0
      %v1003 = vadd.f32 %v841, %v1002
      %v1004 = vpop.f32.mrf.mxu0
      %1005 = vmatprep.mubr.f32.mxu0 0.0
      %1006 = vmatmul.mubr.f32.gmra.mxu0 %v874
      %v1007 = vpop.f32.mrf.mxu0
      %v1008 = vadd.f32 %v841, %v1007
      %v1009 = vpop.f32.mrf.mxu0
      %1010 = vmatprep.mubr.f32.mxu0 0.0
      %1011 = vmatmul.mubr.f32.gmra.mxu0 %v877
      %v1012 = vpop.f32.mrf.mxu0
      %v1013 = vadd.f32 %v841, %v1012
      %v1014 = vpop.f32.mrf.mxu0
      %1015 = vmatprep.mubr.f32.mxu0 0.0
      %1016 = vmatmul.mubr.f32.gmra.mxu0 %v880
      %v1017 = vpop.f32.mrf.mxu0
      %v1018 = vadd.f32 %v841, %v1017
      %v1019 = vpop.f32.mrf.mxu0
      %1020 = vmatprep.mubr.f32.mxu0 0.0
      %1021 = vmatmul.mubr.f32.gmra.mxu0 %v883
      %v1022 = vpop.f32.mrf.mxu0
      %v1023 = vadd.f32 %v841, %v1022
      %v1024 = vpop.f32.mrf.mxu0
      %1025 = vmatprep.mubr.f32.mxu0 0.0
      %1026 = vmatmul.mubr.f32.gmra.mxu0 %v886
      %v1027 = vpop.f32.mrf.mxu0
      %v1028 = vadd.f32 %v841, %v1027
      %v1029 = vpop.f32.mrf.mxu0
      %1030 = vmatprep.mubr.f32.mxu0 0.0
      %1031 = vmatmul.mubr.f32.gmra.mxu0 %v889
      %v1032 = vpop.f32.mrf.mxu0
      %v1033 = vadd.f32 %v841, %v1032
      %v1034 = vpop.f32.mrf.mxu0
      %1035 = vdwg.mxu0
      %v1036 = vld [vmem:[%s584] sm:$0xff]
      %v1037 = vld [vmem:[%s584 + $0x8] sm:$0xff]
      %v1038 = vld [vmem:[%s584 + $0x10] sm:$0xff]
      %v1039 = vld [vmem:[%s584 + $0x18] sm:$0xff]
      %v1040 = vld [vmem:[%s584 + $0x20] sm:$0xff]
      %v1041 = vld [vmem:[%s584 + $0x28] sm:$0xff]
      %v1042 = vld [vmem:[%s584 + $0x30] sm:$0xff]
      %v1043 = vld [vmem:[%s584 + $0x38] sm:$0xff]
      %v1044 = vld [vmem:[%s584 + $0x40] sm:$0xff]
      %v1045 = vld [vmem:[%s584 + $0x48] sm:$0xff]
      %v1046 = vld [vmem:[%s584 + $0x50] sm:$0xff]
      %v1047 = vld [vmem:[%s584 + $0x58] sm:$0xff]
      %v1048 = vld [vmem:[%s584 + $0x60] sm:$0xff]
      %v1049 = vld [vmem:[%s584 + $0x68] sm:$0xff]
      %v1050 = vld [vmem:[%s584 + $0x70] sm:$0xff]
      %v1051 = vld [vmem:[%s584 + $0x78] sm:$0xff]
      %v1052 = vld [vmem:[%s7] sm:$0xff]
      %v1053 = vld [vmem:[%s7 + $0x8] sm:$0xff]
      %v1054 = vld [vmem:[%s591] sm:$0xff]
      %v1055 = vld [vmem:[%s591 + $0x8] sm:$0xff]
      %v1056 = vld [vmem:[%s591 + $0x10] sm:$0xff]
      %v1057 = vld [vmem:[%s591 + $0x18] sm:$0xff]
      %v1058 = vld [vmem:[%s591 + $0x20] sm:$0xff]
      %v1059 = vld [vmem:[%s591 + $0x28] sm:$0xff]
      %v1060 = vld [vmem:[%s591 + $0x30] sm:$0xff]
      %v1061 = vld [vmem:[%s591 + $0x38] sm:$0xff]
      %v1062 = vld [vmem:[%s591 + $0x40] sm:$0xff]
      %v1063 = vld [vmem:[%s591 + $0x48] sm:$0xff]
      %v1064 = vld [vmem:[%s591 + $0x50] sm:$0xff]
      %v1065 = vld [vmem:[%s591 + $0x58] sm:$0xff]
      %v1066 = vld [vmem:[%s591 + $0x60] sm:$0xff]
      %v1067 = vld [vmem:[%s591 + $0x68] sm:$0xff]
      %v1068 = vld [vmem:[%s591 + $0x70] sm:$0xff]
      %v1069 = vld [vmem:[%s591 + $0x78] sm:$0xff]
      %v1070 = vld [vmem:[%s591 + $0x80] sm:$0xff]
      %v1071 = vld [vmem:[%s591 + $0x88] sm:$0xff]
      %v1072 = vld [vmem:[%s591 + $0x90] sm:$0xff]
      %v1073 = vld [vmem:[%s591 + $0x98] sm:$0xff]
      %v1074 = vld [vmem:[%s591 + $0xa0] sm:$0xff]
      %v1075 = vld [vmem:[%s591 + $0xa8] sm:$0xff]
      %v1076 = vld [vmem:[%s591 + $0xb0] sm:$0xff]
      %v1077 = vld [vmem:[%s591 + $0xb8] sm:$0xff]
      %v1078 = vld [vmem:[%s591 + $0xc0] sm:$0xff]
      %v1079 = vld [vmem:[%s591 + $0xc8] sm:$0xff]
      %v1080 = vld [vmem:[%s591 + $0xd0] sm:$0xff]
      %v1081 = vld [vmem:[%s591 + $0xd8] sm:$0xff]
      %v1082 = vld [vmem:[%s591 + $0xe0] sm:$0xff]
      %v1083 = vld [vmem:[%s591 + $0xe8] sm:$0xff]
      %v1084 = vld [vmem:[%s591 + $0xf0] sm:$0xff]
      %v1085 = vld [vmem:[%s591 + $0xf8] sm:$0xff]
      %v1086 = vld [vmem:[%s591 + $0x100] sm:$0xff]
      %v1087 = vld [vmem:[%s591 + $0x108] sm:$0xff]
      %v1088 = vld [vmem:[%s591 + $0x110] sm:$0xff]
      %v1089 = vld [vmem:[%s591 + $0x118] sm:$0xff]
      %v1090 = vld [vmem:[%s591 + $0x120] sm:$0xff]
      %v1091 = vld [vmem:[%s591 + $0x128] sm:$0xff]
      %v1092 = vld [vmem:[%s591 + $0x130] sm:$0xff]
      %v1093 = vld [vmem:[%s591 + $0x138] sm:$0xff]
      %v1094 = vld [vmem:[%s591 + $0x140] sm:$0xff]
      %v1095 = vld [vmem:[%s591 + $0x148] sm:$0xff]
      %v1096 = vld [vmem:[%s591 + $0x150] sm:$0xff]
      %v1097 = vld [vmem:[%s591 + $0x158] sm:$0xff]
      %v1098 = vld [vmem:[%s591 + $0x160] sm:$0xff]
      %v1099 = vld [vmem:[%s591 + $0x168] sm:$0xff]
      %v1100 = vld [vmem:[%s591 + $0x170] sm:$0xff]
      %v1101 = vld [vmem:[%s591 + $0x178] sm:$0xff]
      %v1102 = vld [vmem:[%s591 + $0x180] sm:$0xff]
      %v1103 = vld [vmem:[%s591 + $0x188] sm:$0xff]
      %v1104 = vld [vmem:[%s591 + $0x190] sm:$0xff]
      %v1105 = vld [vmem:[%s591 + $0x198] sm:$0xff]
      %v1106 = vld [vmem:[%s591 + $0x1a0] sm:$0xff]
      %v1107 = vld [vmem:[%s591 + $0x1a8] sm:$0xff]
      %v1108 = vld [vmem:[%s591 + $0x1b0] sm:$0xff]
      %v1109 = vld [vmem:[%s591 + $0x1b8] sm:$0xff]
      %v1110 = vld [vmem:[%s591 + $0x1c0] sm:$0xff]
      %v1111 = vld [vmem:[%s591 + $0x1c8] sm:$0xff]
      %v1112 = vld [vmem:[%s591 + $0x1d0] sm:$0xff]
      %v1113 = vld [vmem:[%s591 + $0x1d8] sm:$0xff]
      %v1114 = vld [vmem:[%s591 + $0x1e0] sm:$0xff]
      %v1115 = vld [vmem:[%s591 + $0x1e8] sm:$0xff]
      %v1116 = vld [vmem:[%s591 + $0x1f0] sm:$0xff]
      %v1117 = vld [vmem:[%s591 + $0x1f8] sm:$0xff]
      %v1118 = vld [vmem:[%s8] sm:$0xff]
      %v1119 = vld [vmem:[%s8 + $0x8] sm:$0xff]
      %v1120 = vld [vmem:[%s8 + $0x10] sm:$0xff]
      %v1121 = vld [vmem:[%s8 + $0x18] sm:$0xff]
      %v1122 = vld [vmem:[%s8 + $0x20] sm:$0xff]
      %v1123 = vld [vmem:[%s8 + $0x28] sm:$0xff]
      %v1124 = vld [vmem:[%s8 + $0x30] sm:$0xff]
      %v1125 = vld [vmem:[%s8 + $0x38] sm:$0xff]
      %v1126 = vld [vmem:[%s8 + $0x40] sm:$0xff]
      %v1127 = vld [vmem:[%s8 + $0x48] sm:$0xff]
      %v1128 = vld [vmem:[%s8 + $0x50] sm:$0xff]
      %v1129 = vld [vmem:[%s8 + $0x58] sm:$0xff]
      %v1130 = vld [vmem:[%s8 + $0x60] sm:$0xff]
      %v1131 = vld [vmem:[%s8 + $0x68] sm:$0xff]
      %v1132 = vld [vmem:[%s8 + $0x70] sm:$0xff]
      %v1133 = vld [vmem:[%s8 + $0x78] sm:$0xff]
      %v1134 = vld [vmem:[%s8 + $0x80] sm:$0xff]
      %v1135 = vld [vmem:[%s8 + $0x88] sm:$0xff]
      %v1136 = vld [vmem:[%s8 + $0x90] sm:$0xff]
      %v1137 = vld [vmem:[%s8 + $0x98] sm:$0xff]
      %v1138 = vld [vmem:[%s8 + $0xa0] sm:$0xff]
      %v1139 = vld [vmem:[%s8 + $0xa8] sm:$0xff]
      %v1140 = vld [vmem:[%s8 + $0xb0] sm:$0xff]
      %v1141 = vld [vmem:[%s8 + $0xb8] sm:$0xff]
      %v1142 = vld [vmem:[%s8 + $0xc0] sm:$0xff]
      %v1143 = vld [vmem:[%s8 + $0xc8] sm:$0xff]
      %v1144 = vld [vmem:[%s8 + $0xd0] sm:$0xff]
      %v1145 = vld [vmem:[%s8 + $0xd8] sm:$0xff]
      %v1146 = vld [vmem:[%s8 + $0xe0] sm:$0xff]
      %v1147 = vld [vmem:[%s8 + $0xe8] sm:$0xff]
      %v1148 = vld [vmem:[%s8 + $0xf0] sm:$0xff]
      %v1149 = vld [vmem:[%s8 + $0xf8] sm:$0xff]
      %v1150 = vld [vmem:[%s8 + $0x100] sm:$0xff]
      %v1151 = vld [vmem:[%s8 + $0x108] sm:$0xff]
      %v1152 = vld [vmem:[%s8 + $0x110] sm:$0xff]
      %v1153 = vld [vmem:[%s8 + $0x118] sm:$0xff]
      %v1154 = vld [vmem:[%s8 + $0x120] sm:$0xff]
      %v1155 = vld [vmem:[%s8 + $0x128] sm:$0xff]
      %v1156 = vld [vmem:[%s8 + $0x130] sm:$0xff]
      %v1157 = vld [vmem:[%s8 + $0x138] sm:$0xff]
      %v1158 = vld [vmem:[%s8 + $0x140] sm:$0xff]
      %v1159 = vld [vmem:[%s8 + $0x148] sm:$0xff]
      %v1160 = vld [vmem:[%s8 + $0x150] sm:$0xff]
      %v1161 = vld [vmem:[%s8 + $0x158] sm:$0xff]
      %v1162 = vld [vmem:[%s8 + $0x160] sm:$0xff]
      %v1163 = vld [vmem:[%s8 + $0x168] sm:$0xff]
      %v1164 = vld [vmem:[%s8 + $0x170] sm:$0xff]
      %v1165 = vld [vmem:[%s8 + $0x178] sm:$0xff]
      %v1166 = vld [vmem:[%s8 + $0x180] sm:$0x3]
      %vm1167 = vcmask 15360
      %v1169 = vsel %vm1167, %v1057, 0
      %v1172 = vsel %vm1167, %v1061, 0
      %v1175 = vsel %vm1167, %v1065, 0
      %v1178 = vsel %vm1167, %v1069, 0
      %v1181 = vsel %vm1167, %v1073, 0
      %v1184 = vsel %vm1167, %v1077, 0
      %v1187 = vsel %vm1167, %v1081, 0
      %v1190 = vsel %vm1167, %v1085, 0
      %v1193 = vsel %vm1167, %v1089, 0
      %v1196 = vsel %vm1167, %v1093, 0
      %v1199 = vsel %vm1167, %v1097, 0
      %v1202 = vsel %vm1167, %v1101, 0
      %v1205 = vsel %vm1167, %v1105, 0
      %v1208 = vsel %vm1167, %v1109, 0
      %v1211 = vsel %vm1167, %v1113, 0
      %v1214 = vsel %vm1167, %v1117, 0
      %vm1216 = vcmask 1041408
      %v1218 = vsel %vm1216, %v1166, 0
      %1220 = vmatprep.subr.mxu0 0.0
      %1221 = vmatpush1.msra.mxu0 %v1133
      %1222 = vmatprep.subr.mxu0 0.0
      %1223 = vmatpush1.msra.mxu0 %v1132
      %1224 = vmatprep.subr.mxu0 0.0
      %1225 = vmatpush1.msra.mxu0 %v1131
      %1226 = vmatprep.subr.mxu0 0.0
      %1227 = vmatpush1.msra.mxu0 %v1130
      %1228 = vmatprep.subr.mxu0 0.0
      %1229 = vmatpush1.msra.mxu0 %v1129
      %1230 = vmatprep.subr.mxu0 0.0
      %1231 = vmatpush1.msra.mxu0 %v1128
      %1232 = vmatprep.subr.mxu0 0.0
      %1233 = vmatpush1.msra.mxu0 %v1127
      %1234 = vmatprep.subr.mxu0 0.0
      %1235 = vmatpush1.msra.mxu0 %v1126
      %1236 = vmatprep.subr.mxu0 0.0
      %1237 = vmatpush1.msra.mxu0 %v1125
      %1238 = vmatprep.subr.mxu0 0.0
      %1239 = vmatpush1.msra.mxu0 %v1124
      %1240 = vmatprep.subr.mxu0 0.0
      %1241 = vmatpush1.msra.mxu0 %v1123
      %1242 = vmatprep.subr.mxu0 0.0
      %1243 = vmatpush1.msra.mxu0 %v1122
      %1244 = vmatprep.subr.mxu0 0.0
      %1245 = vmatpush1.msra.mxu0 %v1121
      %1246 = vmatprep.subr.mxu0 0.0
      %1247 = vmatpush1.msra.mxu0 %v1120
      %1248 = vmatprep.subr.mxu0 0.0
      %1249 = vmatpush1.msra.mxu0 %v1119
      %1250 = vmatprep.subr.mxu0 0.0
      %1251 = vmatpush1.msra.mxu0 %v1118
      %1252 = vmatprep.subr.mxu0 0.0
      %1253 = vmatpush2.msra.mxu0 %v1149
      %1254 = vmatprep.subr.mxu0 0.0
      %1255 = vmatpush2.msra.mxu0 %v1148
      %1256 = vmatprep.subr.mxu0 0.0
      %1257 = vmatpush2.msra.mxu0 %v1147
      %1258 = vmatprep.subr.mxu0 0.0
      %1259 = vmatpush2.msra.mxu0 %v1146
      %1260 = vmatprep.subr.mxu0 0.0
      %1261 = vmatpush2.msra.mxu0 %v1145
      %1262 = vmatprep.subr.mxu0 0.0
      %1263 = vmatpush2.msra.mxu0 %v1144
      %1264 = vmatprep.subr.mxu0 0.0
      %1265 = vmatpush2.msra.mxu0 %v1143
      %1266 = vmatprep.subr.mxu0 0.0
      %1267 = vmatpush2.msra.mxu0 %v1142
      %1268 = vmatprep.subr.mxu0 0.0
      %1269 = vmatpush2.msra.mxu0 %v1141
      %1270 = vmatprep.subr.mxu0 0.0
      %1271 = vmatpush2.msra.mxu0 %v1140
      %1272 = vmatprep.subr.mxu0 0.0
      %1273 = vmatpush2.msra.mxu0 %v1139
      %1274 = vmatprep.subr.mxu0 0.0
      %1275 = vmatpush2.msra.mxu0 %v1138
      %1276 = vmatprep.subr.mxu0 0.0
      %1277 = vmatpush2.msra.mxu0 %v1137
      %1278 = vmatprep.subr.mxu0 0.0
      %1279 = vmatpush2.msra.mxu0 %v1136
      %1280 = vmatprep.subr.mxu0 0.0
      %1281 = vmatpush2.msra.mxu0 %v1135
      %1282 = vmatprep.subr.mxu0 0.0
      %1283 = vmatpush2.msra.mxu0 %v1134
      %1284 = vmatprep.mubr.f32.mxu0 %v1055
      %1285 = vmatmul.mubr.f32.gmra.mxu0 %v1054
      %v1286 = vpop.f32.mrf.mxu0
      %v1287 = vadd.f32 0.0, %v1286
      %v1288 = vpop.f32.mrf.mxu0
      %1289 = vmatprep.mubr.f32.mxu0 %v1059
      %1290 = vmatmul.mubr.f32.gmra.mxu0 %v1058
      %v1291 = vpop.f32.mrf.mxu0
      %v1292 = vadd.f32 0.0, %v1291
      %v1293 = vpop.f32.mrf.mxu0
      %1294 = vmatprep.mubr.f32.mxu0 %v1063
      %1295 = vmatmul.mubr.f32.gmra.mxu0 %v1062
      %v1296 = vpop.f32.mrf.mxu0
      %v1297 = vadd.f32 0.0, %v1296
      %v1298 = vpop.f32.mrf.mxu0
      %1299 = vmatprep.mubr.f32.mxu0 %v1067
      %1300 = vmatmul.mubr.f32.gmra.mxu0 %v1066
      %v1301 = vpop.f32.mrf.mxu0
      %v1302 = vadd.f32 0.0, %v1301
      %v1303 = vpop.f32.mrf.mxu0
      %1304 = vmatprep.mubr.f32.mxu0 %v1071
      %1305 = vmatmul.mubr.f32.gmra.mxu0 %v1070
      %v1306 = vpop.f32.mrf.mxu0
      %v1307 = vadd.f32 0.0, %v1306
      %v1308 = vpop.f32.mrf.mxu0
      %1309 = vmatprep.mubr.f32.mxu0 %v1075
      %1310 = vmatmul.mubr.f32.gmra.mxu0 %v1074
      %v1311 = vpop.f32.mrf.mxu0
      %v1312 = vadd.f32 0.0, %v1311
      %v1313 = vpop.f32.mrf.mxu0
      %1314 = vmatprep.mubr.f32.mxu0 %v1079
      %1315 = vmatmul.mubr.f32.gmra.mxu0 %v1078
      %v1316 = vpop.f32.mrf.mxu0
      %v1317 = vadd.f32 0.0, %v1316
      %v1318 = vpop.f32.mrf.mxu0
      %1319 = vmatprep.mubr.f32.mxu0 %v1083
      %1320 = vmatmul.mubr.f32.gmra.mxu0 %v1082
      %v1321 = vpop.f32.mrf.mxu0
      %v1322 = vadd.f32 0.0, %v1321
      %v1323 = vpop.f32.mrf.mxu0
      %1324 = vmatprep.mubr.f32.mxu0 %v1087
      %1325 = vmatmul.mubr.f32.gmra.mxu0 %v1086
      %v1326 = vpop.f32.mrf.mxu0
      %v1327 = vadd.f32 0.0, %v1326
      %v1328 = vpop.f32.mrf.mxu0
      %1329 = vmatprep.mubr.f32.mxu0 %v1091
      %1330 = vmatmul.mubr.f32.gmra.mxu0 %v1090
      %v1331 = vpop.f32.mrf.mxu0
      %v1332 = vadd.f32 0.0, %v1331
      %v1333 = vpop.f32.mrf.mxu0
      %1334 = vmatprep.mubr.f32.mxu0 %v1095
      %1335 = vmatmul.mubr.f32.gmra.mxu0 %v1094
      %v1336 = vpop.f32.mrf.mxu0
      %v1337 = vadd.f32 0.0, %v1336
      %v1338 = vpop.f32.mrf.mxu0
      %1339 = vmatprep.mubr.f32.mxu0 %v1099
      %1340 = vmatmul.mubr.f32.gmra.mxu0 %v1098
      %v1341 = vpop.f32.mrf.mxu0
      %v1342 = vadd.f32 0.0, %v1341
      %v1343 = vpop.f32.mrf.mxu0
      %1344 = vmatprep.mubr.f32.mxu0 %v1103
      %1345 = vmatmul.mubr.f32.gmra.mxu0 %v1102
      %v1346 = vpop.f32.mrf.mxu0
      %v1347 = vadd.f32 0.0, %v1346
      %v1348 = vpop.f32.mrf.mxu0
      %1349 = vmatprep.mubr.f32.mxu0 %v1107
      %1350 = vmatmul.mubr.f32.gmra.mxu0 %v1106
      %v1351 = vpop.f32.mrf.mxu0
      %v1352 = vadd.f32 0.0, %v1351
      %v1353 = vpop.f32.mrf.mxu0
      %1354 = vmatprep.mubr.f32.mxu0 %v1111
      %1355 = vmatmul.mubr.f32.gmra.mxu0 %v1110
      %v1356 = vpop.f32.mrf.mxu0
      %v1357 = vadd.f32 0.0, %v1356
      %v1358 = vpop.f32.mrf.mxu0
      %1359 = vmatprep.mubr.f32.mxu0 %v1115
      %1360 = vmatmul.mubr.f32.gmra.mxu0 %v1114
      %v1361 = vpop.f32.mrf.mxu0
      %v1362 = vadd.f32 0.0, %v1361
      %v1363 = vpop.f32.mrf.mxu0
      %1364 = vdwg.mxu0
      %1365 = vmatprep.subr.mxu0 0.0
      %1366 = vmatpush1.msra.mxu0 %v1165
      %1367 = vmatprep.subr.mxu0 0.0
      %1368 = vmatpush1.msra.mxu0 %v1164
      %1369 = vmatprep.subr.mxu0 0.0
      %1370 = vmatpush1.msra.mxu0 %v1163
      %1371 = vmatprep.subr.mxu0 0.0
      %1372 = vmatpush1.msra.mxu0 %v1162
      %1373 = vmatprep.subr.mxu0 0.0
      %1374 = vmatpush1.msra.mxu0 %v1161
      %1375 = vmatprep.subr.mxu0 0.0
      %1376 = vmatpush1.msra.mxu0 %v1160
      %1377 = vmatprep.subr.mxu0 0.0
      %1378 = vmatpush1.msra.mxu0 %v1159
      %1379 = vmatprep.subr.mxu0 0.0
      %1380 = vmatpush1.msra.mxu0 %v1158
      %1381 = vmatprep.subr.mxu0 0.0
      %1382 = vmatpush1.msra.mxu0 %v1157
      %1383 = vmatprep.subr.mxu0 0.0
      %1384 = vmatpush1.msra.mxu0 %v1156
      %1385 = vmatprep.subr.mxu0 0.0
      %1386 = vmatpush1.msra.mxu0 %v1155
      %1387 = vmatprep.subr.mxu0 0.0
      %1388 = vmatpush1.msra.mxu0 %v1154
      %1389 = vmatprep.subr.mxu0 0.0
      %1390 = vmatpush1.msra.mxu0 %v1153
      %1391 = vmatprep.subr.mxu0 0.0
      %1392 = vmatpush1.msra.mxu0 %v1152
      %1393 = vmatprep.subr.mxu0 0.0
      %1394 = vmatpush1.msra.mxu0 %v1151
      %1395 = vmatprep.subr.mxu0 0.0
      %1396 = vmatpush1.msra.mxu0 %v1150
      %1397 = vmatprep.subr.mxu0 0.0
      %1398 = vmatpush2.msra.mxu0 0.0
      %1399 = vmatprep.subr.mxu0 0.0
      %1400 = vmatpush2.msra.mxu0 0.0
      %1401 = vmatprep.subr.mxu0 0.0
      %1402 = vmatpush2.msra.mxu0 0.0
      %1403 = vmatprep.subr.mxu0 0.0
      %1404 = vmatpush2.msra.mxu0 0.0
      %1405 = vmatprep.subr.mxu0 0.0
      %1406 = vmatpush2.msra.mxu0 0.0
      %1407 = vmatprep.subr.mxu0 0.0
      %1408 = vmatpush2.msra.mxu0 0.0
      %1409 = vmatprep.subr.mxu0 0.0
      %1410 = vmatpush2.msra.mxu0 0.0
      %1411 = vmatprep.subr.mxu0 0.0
      %1412 = vmatpush2.msra.mxu0 0.0
      %1413 = vmatprep.subr.mxu0 0.0
      %1414 = vmatpush2.msra.mxu0 0.0
      %1415 = vmatprep.subr.mxu0 0.0
      %1416 = vmatpush2.msra.mxu0 0.0
      %1417 = vmatprep.subr.mxu0 0.0
      %1418 = vmatpush2.msra.mxu0 0.0
      %1419 = vmatprep.subr.mxu0 0.0
      %1420 = vmatpush2.msra.mxu0 0.0
      %1421 = vmatprep.subr.mxu0 0.0
      %1422 = vmatpush2.msra.mxu0 0.0
      %1423 = vmatprep.subr.mxu0 0.0
      %1424 = vmatpush2.msra.mxu0 0.0
      %1425 = vmatprep.subr.mxu0 0.0
      %1426 = vmatpush2.msra.mxu0 0.0
      %1427 = vmatprep.subr.mxu0 0.0
      %1428 = vmatpush2.msra.mxu0 %v1218
      %1429 = vmatprep.mubr.f32.mxu0 %v1169
      %1430 = vmatmul.mubr.f32.gmra.mxu0 %v1056
      %v1431 = vpop.f32.mrf.mxu0
      %v1432 = vadd.f32 %v1287, %v1431
      %v1433 = vpop.f32.mrf.mxu0
      %1434 = vmatprep.mubr.f32.mxu0 %v1172
      %1435 = vmatmul.mubr.f32.gmra.mxu0 %v1060
      %v1436 = vpop.f32.mrf.mxu0
      %v1437 = vadd.f32 %v1292, %v1436
      %v1438 = vpop.f32.mrf.mxu0
      %1439 = vmatprep.mubr.f32.mxu0 %v1175
      %1440 = vmatmul.mubr.f32.gmra.mxu0 %v1064
      %v1441 = vpop.f32.mrf.mxu0
      %v1442 = vadd.f32 %v1297, %v1441
      %v1443 = vpop.f32.mrf.mxu0
      %1444 = vmatprep.mubr.f32.mxu0 %v1178
      %1445 = vmatmul.mubr.f32.gmra.mxu0 %v1068
      %v1446 = vpop.f32.mrf.mxu0
      %v1447 = vadd.f32 %v1302, %v1446
      %v1448 = vpop.f32.mrf.mxu0
      %1449 = vmatprep.mubr.f32.mxu0 %v1181
      %1450 = vmatmul.mubr.f32.gmra.mxu0 %v1072
      %v1451 = vpop.f32.mrf.mxu0
      %v1452 = vadd.f32 %v1307, %v1451
      %v1453 = vpop.f32.mrf.mxu0
      %1454 = vmatprep.mubr.f32.mxu0 %v1184
      %1455 = vmatmul.mubr.f32.gmra.mxu0 %v1076
      %v1456 = vpop.f32.mrf.mxu0
      %v1457 = vadd.f32 %v1312, %v1456
      %v1458 = vpop.f32.mrf.mxu0
      %1459 = vmatprep.mubr.f32.mxu0 %v1187
      %1460 = vmatmul.mubr.f32.gmra.mxu0 %v1080
      %v1461 = vpop.f32.mrf.mxu0
      %v1462 = vadd.f32 %v1317, %v1461
      %v1463 = vpop.f32.mrf.mxu0
      %1464 = vmatprep.mubr.f32.mxu0 %v1190
      %1465 = vmatmul.mubr.f32.gmra.mxu0 %v1084
      %v1466 = vpop.f32.mrf.mxu0
      %v1467 = vadd.f32 %v1322, %v1466
      %v1468 = vpop.f32.mrf.mxu0
      %1469 = vmatprep.mubr.f32.mxu0 %v1193
      %1470 = vmatmul.mubr.f32.gmra.mxu0 %v1088
      %v1471 = vpop.f32.mrf.mxu0
      %v1472 = vadd.f32 %v1327, %v1471
      %v1473 = vpop.f32.mrf.mxu0
      %1474 = vmatprep.mubr.f32.mxu0 %v1196
      %1475 = vmatmul.mubr.f32.gmra.mxu0 %v1092
      %v1476 = vpop.f32.mrf.mxu0
      %v1477 = vadd.f32 %v1332, %v1476
      %v1478 = vpop.f32.mrf.mxu0
      %1479 = vmatprep.mubr.f32.mxu0 %v1199
      %1480 = vmatmul.mubr.f32.gmra.mxu0 %v1096
      %v1481 = vpop.f32.mrf.mxu0
      %v1482 = vadd.f32 %v1337, %v1481
      %v1483 = vpop.f32.mrf.mxu0
      %1484 = vmatprep.mubr.f32.mxu0 %v1202
      %1485 = vmatmul.mubr.f32.gmra.mxu0 %v1100
      %v1486 = vpop.f32.mrf.mxu0
      %v1487 = vadd.f32 %v1342, %v1486
      %v1488 = vpop.f32.mrf.mxu0
      %1489 = vmatprep.mubr.f32.mxu0 %v1205
      %1490 = vmatmul.mubr.f32.gmra.mxu0 %v1104
      %v1491 = vpop.f32.mrf.mxu0
      %v1492 = vadd.f32 %v1347, %v1491
      %v1493 = vpop.f32.mrf.mxu0
      %1494 = vmatprep.mubr.f32.mxu0 %v1208
      %1495 = vmatmul.mubr.f32.gmra.mxu0 %v1108
      %v1496 = vpop.f32.mrf.mxu0
      %v1497 = vadd.f32 %v1352, %v1496
      %v1498 = vpop.f32.mrf.mxu0
      %1499 = vmatprep.mubr.f32.mxu0 %v1211
      %1500 = vmatmul.mubr.f32.gmra.mxu0 %v1112
      %v1501 = vpop.f32.mrf.mxu0
      %v1502 = vadd.f32 %v1357, %v1501
      %v1503 = vpop.f32.mrf.mxu0
      %1504 = vmatprep.mubr.f32.mxu0 %v1214
      %1505 = vmatmul.mubr.f32.gmra.mxu0 %v1116
      %v1506 = vpop.f32.mrf.mxu0
      %v1507 = vadd.f32 %v1362, %v1506
      %v1508 = vpop.f32.mrf.mxu0
      %1509 = vdwg.mxu0
      %v1511 = vsel %vm624, %v1036, 0
      %v1514 = vsel %vm624, %v1037, 0
      %v1517 = vsel %vm624, %v1038, 0
      %v1520 = vsel %vm624, %v1039, 0
      %v1523 = vsel %vm624, %v1040, 0
      %v1526 = vsel %vm624, %v1041, 0
      %v1529 = vsel %vm624, %v1042, 0
      %v1532 = vsel %vm624, %v1043, 0
      %v1535 = vsel %vm624, %v1044, 0
      %v1538 = vsel %vm624, %v1045, 0
      %v1541 = vsel %vm624, %v1046, 0
      %v1544 = vsel %vm624, %v1047, 0
      %v1547 = vsel %vm624, %v1048, 0
      %v1550 = vsel %vm624, %v1049, 0
      %v1553 = vsel %vm624, %v1050, 0
      %v1556 = vsel %vm624, %v1051, 0
      %1558 = vmatprep.subr.mxu0 0.0
      %1559 = vmatpush1.msra.mxu0 0.0
      %1560 = vmatprep.subr.mxu0 0.0
      %1561 = vmatpush1.msra.mxu0 0.0
      %1562 = vmatprep.subr.mxu0 0.0
      %1563 = vmatpush1.msra.mxu0 0.0
      %1564 = vmatprep.subr.mxu0 0.0
      %1565 = vmatpush1.msra.mxu0 0.0
      %1566 = vmatprep.subr.mxu0 0.0
      %1567 = vmatpush1.msra.mxu0 0.0
      %1568 = vmatprep.subr.mxu0 0.0
      %1569 = vmatpush1.msra.mxu0 0.0
      %1570 = vmatprep.subr.mxu0 0.0
      %1571 = vmatpush1.msra.mxu0 0.0
      %1572 = vmatprep.subr.mxu0 0.0
      %1573 = vmatpush1.msra.mxu0 0.0
      %1574 = vmatprep.subr.mxu0 0.0
      %1575 = vmatpush1.msra.mxu0 0.0
      %1576 = vmatprep.subr.mxu0 0.0
      %1577 = vmatpush1.msra.mxu0 0.0
      %1578 = vmatprep.subr.mxu0 0.0
      %1579 = vmatpush1.msra.mxu0 0.0
      %1580 = vmatprep.subr.mxu0 0.0
      %1581 = vmatpush1.msra.mxu0 0.0
      %1582 = vmatprep.subr.mxu0 0.0
      %1583 = vmatpush1.msra.mxu0 0.0
      %1584 = vmatprep.subr.mxu0 0.0
      %1585 = vmatpush1.msra.mxu0 0.0
      %1586 = vmatprep.subr.mxu0 0.0
      %1587 = vmatpush1.msra.mxu0 %v1053
      %1588 = vmatprep.subr.mxu0 0.0
      %1589 = vmatpush1.msra.mxu0 %v1052
      %1590 = vmatprep.subr.mxu0 0.0
      %1591 = vmatpush2.msra.mxu0 0.0
      %1592 = vmatprep.subr.mxu0 0.0
      %1593 = vmatpush2.msra.mxu0 0.0
      %1594 = vmatprep.subr.mxu0 0.0
      %1595 = vmatpush2.msra.mxu0 0.0
      %1596 = vmatprep.subr.mxu0 0.0
      %1597 = vmatpush2.msra.mxu0 0.0
      %1598 = vmatprep.subr.mxu0 0.0
      %1599 = vmatpush2.msra.mxu0 0.0
      %1600 = vmatprep.subr.mxu0 0.0
      %1601 = vmatpush2.msra.mxu0 0.0
      %1602 = vmatprep.subr.mxu0 0.0
      %1603 = vmatpush2.msra.mxu0 0.0
      %1604 = vmatprep.subr.mxu0 0.0
      %1605 = vmatpush2.msra.mxu0 0.0
      %1606 = vmatprep.subr.mxu0 0.0
      %1607 = vmatpush2.msra.mxu0 0.0
      %1608 = vmatprep.subr.mxu0 0.0
      %1609 = vmatpush2.msra.mxu0 0.0
      %1610 = vmatprep.subr.mxu0 0.0
      %1611 = vmatpush2.msra.mxu0 0.0
      %1612 = vmatprep.subr.mxu0 0.0
      %1613 = vmatpush2.msra.mxu0 0.0
      %1614 = vmatprep.subr.mxu0 0.0
      %1615 = vmatpush2.msra.mxu0 0.0
      %1616 = vmatprep.subr.mxu0 0.0
      %1617 = vmatpush2.msra.mxu0 0.0
      %1618 = vmatprep.subr.mxu0 0.0
      %1619 = vmatpush2.msra.mxu0 0.0
      %1620 = vmatprep.subr.mxu0 0.0
      %1621 = vmatpush2.msra.mxu0 0.0
      %1622 = vmatprep.mubr.f32.mxu0 0.0
      %1623 = vmatmul.mubr.f32.gmra.mxu0 %v1511
      %v1624 = vpop.f32.mrf.mxu0
      %v1625 = vadd.f32 %v1432, %v1624
      %v1626 = vpop.f32.mrf.mxu0
      %1627 = vmatprep.mubr.f32.mxu0 0.0
      %1628 = vmatmul.mubr.f32.gmra.mxu0 %v1514
      %v1629 = vpop.f32.mrf.mxu0
      %v1630 = vadd.f32 %v1437, %v1629
      %v1631 = vpop.f32.mrf.mxu0
      %1632 = vmatprep.mubr.f32.mxu0 0.0
      %1633 = vmatmul.mubr.f32.gmra.mxu0 %v1517
      %v1634 = vpop.f32.mrf.mxu0
      %v1635 = vadd.f32 %v1442, %v1634
      %v1636 = vpop.f32.mrf.mxu0
      %1637 = vmatprep.mubr.f32.mxu0 0.0
      %1638 = vmatmul.mubr.f32.gmra.mxu0 %v1520
      %v1639 = vpop.f32.mrf.mxu0
      %v1640 = vadd.f32 %v1447, %v1639
      %v1641 = vpop.f32.mrf.mxu0
      %1642 = vmatprep.mubr.f32.mxu0 0.0
      %1643 = vmatmul.mubr.f32.gmra.mxu0 %v1523
      %v1644 = vpop.f32.mrf.mxu0
      %v1645 = vadd.f32 %v1452, %v1644
      %v1646 = vpop.f32.mrf.mxu0
      %1647 = vmatprep.mubr.f32.mxu0 0.0
      %1648 = vmatmul.mubr.f32.gmra.mxu0 %v1526
      %v1649 = vpop.f32.mrf.mxu0
      %v1650 = vadd.f32 %v1457, %v1649
      %v1651 = vpop.f32.mrf.mxu0
      %1652 = vmatprep.mubr.f32.mxu0 0.0
      %1653 = vmatmul.mubr.f32.gmra.mxu0 %v1529
      %v1654 = vpop.f32.mrf.mxu0
      %v1655 = vadd.f32 %v1462, %v1654
      %v1656 = vpop.f32.mrf.mxu0
      %1657 = vmatprep.mubr.f32.mxu0 0.0
      %1658 = vmatmul.mubr.f32.gmra.mxu0 %v1532
      %v1659 = vpop.f32.mrf.mxu0
      %v1660 = vadd.f32 %v1467, %v1659
      %v1661 = vpop.f32.mrf.mxu0
      %1662 = vmatprep.mubr.f32.mxu0 0.0
      %1663 = vmatmul.mubr.f32.gmra.mxu0 %v1535
      %v1664 = vpop.f32.mrf.mxu0
      %v1665 = vadd.f32 %v1472, %v1664
      %v1666 = vpop.f32.mrf.mxu0
      %1667 = vmatprep.mubr.f32.mxu0 0.0
      %1668 = vmatmul.mubr.f32.gmra.mxu0 %v1538
      %v1669 = vpop.f32.mrf.mxu0
      %v1670 = vadd.f32 %v1477, %v1669
      %v1671 = vpop.f32.mrf.mxu0
      %1672 = vmatprep.mubr.f32.mxu0 0.0
      %1673 = vmatmul.mubr.f32.gmra.mxu0 %v1541
      %v1674 = vpop.f32.mrf.mxu0
      %v1675 = vadd.f32 %v1482, %v1674
      %v1676 = vpop.f32.mrf.mxu0
      %1677 = vmatprep.mubr.f32.mxu0 0.0
      %1678 = vmatmul.mubr.f32.gmra.mxu0 %v1544
      %v1679 = vpop.f32.mrf.mxu0
      %v1680 = vadd.f32 %v1487, %v1679
      %v1681 = vpop.f32.mrf.mxu0
      %1682 = vmatprep.mubr.f32.mxu0 0.0
      %1683 = vmatmul.mubr.f32.gmra.mxu0 %v1547
      %v1684 = vpop.f32.mrf.mxu0
      %v1685 = vadd.f32 %v1492, %v1684
      %v1686 = vpop.f32.mrf.mxu0
      %1687 = vmatprep.mubr.f32.mxu0 0.0
      %1688 = vmatmul.mubr.f32.gmra.mxu0 %v1550
      %v1689 = vpop.f32.mrf.mxu0
      %v1690 = vadd.f32 %v1497, %v1689
      %v1691 = vpop.f32.mrf.mxu0
      %1692 = vmatprep.mubr.f32.mxu0 0.0
      %1693 = vmatmul.mubr.f32.gmra.mxu0 %v1553
      %v1694 = vpop.f32.mrf.mxu0
      %v1695 = vadd.f32 %v1502, %v1694
      %v1696 = vpop.f32.mrf.mxu0
      %1697 = vmatprep.mubr.f32.mxu0 0.0
      %1698 = vmatmul.mubr.f32.gmra.mxu0 %v1556
      %v1699 = vpop.f32.mrf.mxu0
      %v1700 = vadd.f32 %v1507, %v1699
      %v1701 = vpop.f32.mrf.mxu0
      %1702 = vdwg.mxu0
      %v1703 = vld [vmem:[%s9] sm:$0x1]
      %v1705 = vlaneseq
      %v1706 = vshrl.u32 %v1705, 7
      %v1707 = vsub.s32 0, %v1706
      %v1708 = vrot.slane %v1703, %v1707
      %v1710 = vadd.f32 %v1625, %v1708
      %v1711 = vadd.f32 %v1630, %v1708
      %v1712 = vadd.f32 %v1635, %v1708
      %v1713 = vadd.f32 %v1640, %v1708
      %v1714 = vadd.f32 %v1645, %v1708
      %v1715 = vadd.f32 %v1650, %v1708
      %v1716 = vadd.f32 %v1655, %v1708
      %v1717 = vadd.f32 %v1660, %v1708
      %v1718 = vadd.f32 %v1665, %v1708
      %v1719 = vadd.f32 %v1670, %v1708
      %v1720 = vadd.f32 %v1675, %v1708
      %v1721 = vadd.f32 %v1680, %v1708
      %v1722 = vadd.f32 %v1685, %v1708
      %v1723 = vadd.f32 %v1690, %v1708
      %v1724 = vadd.f32 %v1695, %v1708
      %v1725 = vadd.f32 %v1700, %v1708
      %v1726 = vmax.f32 %v1710, 0.0
      %v1727 = vmax.f32 %v1711, 0.0
      %v1728 = vmax.f32 %v1712, 0.0
      %v1729 = vmax.f32 %v1713, 0.0
      %v1730 = vmax.f32 %v1714, 0.0
      %v1731 = vmax.f32 %v1715, 0.0
      %v1732 = vmax.f32 %v1716, 0.0
      %v1733 = vmax.f32 %v1717, 0.0
      %v1734 = vmax.f32 %v1718, 0.0
      %v1735 = vmax.f32 %v1719, 0.0
      %v1736 = vmax.f32 %v1720, 0.0
      %v1737 = vmax.f32 %v1721, 0.0
      %v1738 = vmax.f32 %v1722, 0.0
      %v1739 = vmax.f32 %v1723, 0.0
      %v1740 = vmax.f32 %v1724, 0.0
      %v1741 = vmax.f32 %v1725, 0.0
      %v1742 = vld [vmem:[%s10] sm:$0xff]
      %v1743 = vld [vmem:[%s10 + $0x8] sm:$0xff]
      %v1744 = vld [vmem:[%s10 + $0x10] sm:$0xff]
      %v1745 = vld [vmem:[%s10 + $0x18] sm:$0xff]
      %v1746 = vld [vmem:[%s10 + $0x20] sm:$0xff]
      %v1747 = vld [vmem:[%s10 + $0x28] sm:$0xff]
      %v1748 = vld [vmem:[%s10 + $0x30] sm:$0xff]
      %v1749 = vld [vmem:[%s10 + $0x38] sm:$0xff]
      %v1750 = vld [vmem:[%s10 + $0x40] sm:$0xff]
      %v1751 = vld [vmem:[%s10 + $0x48] sm:$0xff]
      %v1752 = vld [vmem:[%s10 + $0x50] sm:$0xff]
      %v1753 = vld [vmem:[%s10 + $0x58] sm:$0xff]
      %v1754 = vld [vmem:[%s10 + $0x60] sm:$0xff]
      %v1755 = vld [vmem:[%s10 + $0x68] sm:$0xff]
      %v1756 = vld [vmem:[%s10 + $0x70] sm:$0xff]
      %v1757 = vld [vmem:[%s10 + $0x78] sm:$0xff]
      %v1758 = vld [vmem:[%s11] sm:$0x1]
      %v1760 = vlaneseq
      %v1761 = vshrl.u32 %v1760, 7
      %v1762 = vsub.s32 0, %v1761
      %v1763 = vrot.slane %v1758, %v1762
      %1765 = vmatprep.subr.mxu0 0.0
      %1766 = vmatpush1.msra.mxu0 %v1757
      %1767 = vmatprep.subr.mxu0 0.0
      %1768 = vmatpush1.msra.mxu0 %v1756
      %1769 = vmatprep.subr.mxu0 0.0
      %1770 = vmatpush1.msra.mxu0 %v1755
      %1771 = vmatprep.subr.mxu0 0.0
      %1772 = vmatpush1.msra.mxu0 %v1754
      %1773 = vmatprep.subr.mxu0 0.0
      %1774 = vmatpush1.msra.mxu0 %v1753
      %1775 = vmatprep.subr.mxu0 0.0
      %1776 = vmatpush1.msra.mxu0 %v1752
      %1777 = vmatprep.subr.mxu0 0.0
      %1778 = vmatpush1.msra.mxu0 %v1751
      %1779 = vmatprep.subr.mxu0 0.0
      %1780 = vmatpush1.msra.mxu0 %v1750
      %1781 = vmatprep.subr.mxu0 0.0
      %1782 = vmatpush1.msra.mxu0 %v1749
      %1783 = vmatprep.subr.mxu0 0.0
      %1784 = vmatpush1.msra.mxu0 %v1748
      %1785 = vmatprep.subr.mxu0 0.0
      %1786 = vmatpush1.msra.mxu0 %v1747
      %1787 = vmatprep.subr.mxu0 0.0
      %1788 = vmatpush1.msra.mxu0 %v1746
      %1789 = vmatprep.subr.mxu0 0.0
      %1790 = vmatpush1.msra.mxu0 %v1745
      %1791 = vmatprep.subr.mxu0 0.0
      %1792 = vmatpush1.msra.mxu0 %v1744
      %1793 = vmatprep.subr.mxu0 0.0
      %1794 = vmatpush1.msra.mxu0 %v1743
      %1795 = vmatprep.subr.mxu0 0.0
      %1796 = vmatpush1.msra.mxu0 %v1742
      %1797 = vmatprep.subr.mxu0 0.0
      %1798 = vmatpush2.msra.mxu0 0.0
      %1799 = vmatprep.subr.mxu0 0.0
      %1800 = vmatpush2.msra.mxu0 0.0
      %1801 = vmatprep.subr.mxu0 0.0
      %1802 = vmatpush2.msra.mxu0 0.0
      %1803 = vmatprep.subr.mxu0 0.0
      %1804 = vmatpush2.msra.mxu0 0.0
      %1805 = vmatprep.subr.mxu0 0.0
      %1806 = vmatpush2.msra.mxu0 0.0
      %1807 = vmatprep.subr.mxu0 0.0
      %1808 = vmatpush2.msra.mxu0 0.0
      %1809 = vmatprep.subr.mxu0 0.0
      %1810 = vmatpush2.msra.mxu0 0.0
      %1811 = vmatprep.subr.mxu0 0.0
      %1812 = vmatpush2.msra.mxu0 0.0
      %1813 = vmatprep.subr.mxu0 0.0
      %1814 = vmatpush2.msra.mxu0 0.0
      %1815 = vmatprep.subr.mxu0 0.0
      %1816 = vmatpush2.msra.mxu0 0.0
      %1817 = vmatprep.subr.mxu0 0.0
      %1818 = vmatpush2.msra.mxu0 0.0
      %1819 = vmatprep.subr.mxu0 0.0
      %1820 = vmatpush2.msra.mxu0 0.0
      %1821 = vmatprep.subr.mxu0 0.0
      %1822 = vmatpush2.msra.mxu0 0.0
      %1823 = vmatprep.subr.mxu0 0.0
      %1824 = vmatpush2.msra.mxu0 0.0
      %1825 = vmatprep.subr.mxu0 0.0
      %1826 = vmatpush2.msra.mxu0 0.0
      %1827 = vmatprep.subr.mxu0 0.0
      %1828 = vmatpush2.msra.mxu0 0.0
      %1829 = vmatprep.mubr.f32.mxu0 0.0
      %1830 = vmatmul.mubr.f32.gmra.mxu0 %v1726
      %v1831 = vpop.f32.mrf.mxu0
      %v1832 = vadd.f32 %v1763, %v1831
      %v1833 = vpop.f32.mrf.mxu0
      %1834 = vmatprep.mubr.f32.mxu0 0.0
      %1835 = vmatmul.mubr.f32.gmra.mxu0 %v1727
      %v1836 = vpop.f32.mrf.mxu0
      %v1837 = vadd.f32 %v1763, %v1836
      %v1838 = vpop.f32.mrf.mxu0
      %1839 = vmatprep.mubr.f32.mxu0 0.0
      %1840 = vmatmul.mubr.f32.gmra.mxu0 %v1728
      %v1841 = vpop.f32.mrf.mxu0
      %v1842 = vadd.f32 %v1763, %v1841
      %v1843 = vpop.f32.mrf.mxu0
      %1844 = vmatprep.mubr.f32.mxu0 0.0
      %1845 = vmatmul.mubr.f32.gmra.mxu0 %v1729
      %v1846 = vpop.f32.mrf.mxu0
      %v1847 = vadd.f32 %v1763, %v1846
      %v1848 = vpop.f32.mrf.mxu0
      %1849 = vmatprep.mubr.f32.mxu0 0.0
      %1850 = vmatmul.mubr.f32.gmra.mxu0 %v1730
      %v1851 = vpop.f32.mrf.mxu0
      %v1852 = vadd.f32 %v1763, %v1851
      %v1853 = vpop.f32.mrf.mxu0
      %1854 = vmatprep.mubr.f32.mxu0 0.0
      %1855 = vmatmul.mubr.f32.gmra.mxu0 %v1731
      %v1856 = vpop.f32.mrf.mxu0
      %v1857 = vadd.f32 %v1763, %v1856
      %v1858 = vpop.f32.mrf.mxu0
      %1859 = vmatprep.mubr.f32.mxu0 0.0
      %1860 = vmatmul.mubr.f32.gmra.mxu0 %v1732
      %v1861 = vpop.f32.mrf.mxu0
      %v1862 = vadd.f32 %v1763, %v1861
      %v1863 = vpop.f32.mrf.mxu0
      %1864 = vmatprep.mubr.f32.mxu0 0.0
      %1865 = vmatmul.mubr.f32.gmra.mxu0 %v1733
      %v1866 = vpop.f32.mrf.mxu0
      %v1867 = vadd.f32 %v1763, %v1866
      %v1868 = vpop.f32.mrf.mxu0
      %1869 = vmatprep.mubr.f32.mxu0 0.0
      %1870 = vmatmul.mubr.f32.gmra.mxu0 %v1734
      %v1871 = vpop.f32.mrf.mxu0
      %v1872 = vadd.f32 %v1763, %v1871
      %v1873 = vpop.f32.mrf.mxu0
      %1874 = vmatprep.mubr.f32.mxu0 0.0
      %1875 = vmatmul.mubr.f32.gmra.mxu0 %v1735
      %v1876 = vpop.f32.mrf.mxu0
      %v1877 = vadd.f32 %v1763, %v1876
      %v1878 = vpop.f32.mrf.mxu0
      %1879 = vmatprep.mubr.f32.mxu0 0.0
      %1880 = vmatmul.mubr.f32.gmra.mxu0 %v1736
      %v1881 = vpop.f32.mrf.mxu0
      %v1882 = vadd.f32 %v1763, %v1881
      %v1883 = vpop.f32.mrf.mxu0
      %1884 = vmatprep.mubr.f32.mxu0 0.0
      %1885 = vmatmul.mubr.f32.gmra.mxu0 %v1737
      %v1886 = vpop.f32.mrf.mxu0
      %v1887 = vadd.f32 %v1763, %v1886
      %v1888 = vpop.f32.mrf.mxu0
      %1889 = vmatprep.mubr.f32.mxu0 0.0
      %1890 = vmatmul.mubr.f32.gmra.mxu0 %v1738
      %v1891 = vpop.f32.mrf.mxu0
      %v1892 = vadd.f32 %v1763, %v1891
      %v1893 = vpop.f32.mrf.mxu0
      %1894 = vmatprep.mubr.f32.mxu0 0.0
      %1895 = vmatmul.mubr.f32.gmra.mxu0 %v1739
      %v1896 = vpop.f32.mrf.mxu0
      %v1897 = vadd.f32 %v1763, %v1896
      %v1898 = vpop.f32.mrf.mxu0
      %1899 = vmatprep.mubr.f32.mxu0 0.0
      %1900 = vmatmul.mubr.f32.gmra.mxu0 %v1740
      %v1901 = vpop.f32.mrf.mxu0
      %v1902 = vadd.f32 %v1763, %v1901
      %v1903 = vpop.f32.mrf.mxu0
      %1904 = vmatprep.mubr.f32.mxu0 0.0
      %1905 = vmatmul.mubr.f32.gmra.mxu0 %v1741
      %v1906 = vpop.f32.mrf.mxu0
      %v1907 = vadd.f32 %v1763, %v1906
      %v1908 = vpop.f32.mrf.mxu0
      %1909 = vdwg.mxu0
      %v1910 = vld [vmem:[%s12] sm:$0xff]
      %v1911 = vld [vmem:[%s12 + $0x8] sm:$0xff]
      %v1912 = vld [vmem:[%s13] sm:$0xff]
      %v1913 = vld [vmem:[%s13 + $0x8] sm:$0xff]
      %v1915 = vsel %vm624, %v1832, 0
      %v1918 = vsel %vm624, %v1837, 0
      %v1921 = vsel %vm624, %v1842, 0
      %v1924 = vsel %vm624, %v1847, 0
      %v1927 = vsel %vm624, %v1852, 0
      %v1930 = vsel %vm624, %v1857, 0
      %v1933 = vsel %vm624, %v1862, 0
      %v1936 = vsel %vm624, %v1867, 0
      %v1939 = vsel %vm624, %v1872, 0
      %v1942 = vsel %vm624, %v1877, 0
      %v1945 = vsel %vm624, %v1882, 0
      %v1948 = vsel %vm624, %v1887, 0
      %v1951 = vsel %vm624, %v1892, 0
      %v1954 = vsel %vm624, %v1897, 0
      %v1957 = vsel %vm624, %v1902, 0
      %v1960 = vsel %vm624, %v1907, 0
      %1962 = vmatprep.subr.mxu0 0.0
      %1963 = vmatpush1.msra.mxu0 0.0
      %1964 = vmatprep.subr.mxu0 0.0
      %1965 = vmatpush1.msra.mxu0 0.0
      %1966 = vmatprep.subr.mxu0 0.0
      %1967 = vmatpush1.msra.mxu0 0.0
      %1968 = vmatprep.subr.mxu0 0.0
      %1969 = vmatpush1.msra.mxu0 0.0
      %1970 = vmatprep.subr.mxu0 0.0
      %1971 = vmatpush1.msra.mxu0 0.0
      %1972 = vmatprep.subr.mxu0 0.0
      %1973 = vmatpush1.msra.mxu0 0.0
      %1974 = vmatprep.subr.mxu0 0.0
      %1975 = vmatpush1.msra.mxu0 0.0
      %1976 = vmatprep.subr.mxu0 0.0
      %1977 = vmatpush1.msra.mxu0 0.0
      %1978 = vmatprep.subr.mxu0 0.0
      %1979 = vmatpush1.msra.mxu0 0.0
      %1980 = vmatprep.subr.mxu0 0.0
      %1981 = vmatpush1.msra.mxu0 0.0
      %1982 = vmatprep.subr.mxu0 0.0
      %1983 = vmatpush1.msra.mxu0 0.0
      %1984 = vmatprep.subr.mxu0 0.0
      %1985 = vmatpush1.msra.mxu0 0.0
      %1986 = vmatprep.subr.mxu0 0.0
      %1987 = vmatpush1.msra.mxu0 0.0
      %1988 = vmatprep.subr.mxu0 0.0
      %1989 = vmatpush1.msra.mxu0 0.0
      %1990 = vmatprep.subr.mxu0 0.0
      %1991 = vmatpush1.msra.mxu0 %v1913
      %1992 = vmatprep.subr.mxu0 0.0
      %1993 = vmatpush1.msra.mxu0 %v1912
      %1994 = vmatprep.subr.mxu0 0.0
      %1995 = vmatpush2.msra.mxu0 0.0
      %1996 = vmatprep.subr.mxu0 0.0
      %1997 = vmatpush2.msra.mxu0 0.0
      %1998 = vmatprep.subr.mxu0 0.0
      %1999 = vmatpush2.msra.mxu0 0.0
      %2000 = vmatprep.subr.mxu0 0.0
      %2001 = vmatpush2.msra.mxu0 0.0
      %2002 = vmatprep.subr.mxu0 0.0
      %2003 = vmatpush2.msra.mxu0 0.0
      %2004 = vmatprep.subr.mxu0 0.0
      %2005 = vmatpush2.msra.mxu0 0.0
      %2006 = vmatprep.subr.mxu0 0.0
      %2007 = vmatpush2.msra.mxu0 0.0
      %2008 = vmatprep.subr.mxu0 0.0
      %2009 = vmatpush2.msra.mxu0 0.0
      %2010 = vmatprep.subr.mxu0 0.0
      %2011 = vmatpush2.msra.mxu0 0.0
      %2012 = vmatprep.subr.mxu0 0.0
      %2013 = vmatpush2.msra.mxu0 0.0
      %2014 = vmatprep.subr.mxu0 0.0
      %2015 = vmatpush2.msra.mxu0 0.0
      %2016 = vmatprep.subr.mxu0 0.0
      %2017 = vmatpush2.msra.mxu0 0.0
      %2018 = vmatprep.subr.mxu0 0.0
      %2019 = vmatpush2.msra.mxu0 0.0
      %2020 = vmatprep.subr.mxu0 0.0
      %2021 = vmatpush2.msra.mxu0 0.0
      %2022 = vmatprep.subr.mxu0 0.0
      %2023 = vmatpush2.msra.mxu0 0.0
      %2024 = vmatprep.subr.mxu0 0.0
      %2025 = vmatpush2.msra.mxu0 0.0
      %2026 = vmatprep.mubr.f32.mxu0 0.0
      %2027 = vmatmul.mubr.f32.gmra.mxu0 %v1915
      %v2028 = vpop.f32.mrf.mxu0
      %v2029 = vadd.f32 0.0, %v2028
      %v2030 = vpop.f32.mrf.mxu0
      %2031 = vmatprep.mubr.f32.mxu0 0.0
      %2032 = vmatmul.mubr.f32.gmra.mxu0 %v1918
      %v2033 = vpop.f32.mrf.mxu0
      %v2034 = vadd.f32 0.0, %v2033
      %v2035 = vpop.f32.mrf.mxu0
      %2036 = vmatprep.mubr.f32.mxu0 0.0
      %2037 = vmatmul.mubr.f32.gmra.mxu0 %v1921
      %v2038 = vpop.f32.mrf.mxu0
      %v2039 = vadd.f32 0.0, %v2038
      %v2040 = vpop.f32.mrf.mxu0
      %2041 = vmatprep.mubr.f32.mxu0 0.0
      %2042 = vmatmul.mubr.f32.gmra.mxu0 %v1924
      %v2043 = vpop.f32.mrf.mxu0
      %v2044 = vadd.f32 0.0, %v2043
      %v2045 = vpop.f32.mrf.mxu0
      %2046 = vmatprep.mubr.f32.mxu0 0.0
      %2047 = vmatmul.mubr.f32.gmra.mxu0 %v1927
      %v2048 = vpop.f32.mrf.mxu0
      %v2049 = vadd.f32 0.0, %v2048
      %v2050 = vpop.f32.mrf.mxu0
      %2051 = vmatprep.mubr.f32.mxu0 0.0
      %2052 = vmatmul.mubr.f32.gmra.mxu0 %v1930
      %v2053 = vpop.f32.mrf.mxu0
      %v2054 = vadd.f32 0.0, %v2053
      %v2055 = vpop.f32.mrf.mxu0
      %2056 = vmatprep.mubr.f32.mxu0 0.0
      %2057 = vmatmul.mubr.f32.gmra.mxu0 %v1933
      %v2058 = vpop.f32.mrf.mxu0
      %v2059 = vadd.f32 0.0, %v2058
      %v2060 = vpop.f32.mrf.mxu0
      %2061 = vmatprep.mubr.f32.mxu0 0.0
      %2062 = vmatmul.mubr.f32.gmra.mxu0 %v1936
      %v2063 = vpop.f32.mrf.mxu0
      %v2064 = vadd.f32 0.0, %v2063
      %v2065 = vpop.f32.mrf.mxu0
      %2066 = vmatprep.mubr.f32.mxu0 0.0
      %2067 = vmatmul.mubr.f32.gmra.mxu0 %v1939
      %v2068 = vpop.f32.mrf.mxu0
      %v2069 = vadd.f32 0.0, %v2068
      %v2070 = vpop.f32.mrf.mxu0
      %2071 = vmatprep.mubr.f32.mxu0 0.0
      %2072 = vmatmul.mubr.f32.gmra.mxu0 %v1942
      %v2073 = vpop.f32.mrf.mxu0
      %v2074 = vadd.f32 0.0, %v2073
      %v2075 = vpop.f32.mrf.mxu0
      %2076 = vmatprep.mubr.f32.mxu0 0.0
      %2077 = vmatmul.mubr.f32.gmra.mxu0 %v1945
      %v2078 = vpop.f32.mrf.mxu0
      %v2079 = vadd.f32 0.0, %v2078
      %v2080 = vpop.f32.mrf.mxu0
      %2081 = vmatprep.mubr.f32.mxu0 0.0
      %2082 = vmatmul.mubr.f32.gmra.mxu0 %v1948
      %v2083 = vpop.f32.mrf.mxu0
      %v2084 = vadd.f32 0.0, %v2083
      %v2085 = vpop.f32.mrf.mxu0
      %2086 = vmatprep.mubr.f32.mxu0 0.0
      %2087 = vmatmul.mubr.f32.gmra.mxu0 %v1951
      %v2088 = vpop.f32.mrf.mxu0
      %v2089 = vadd.f32 0.0, %v2088
      %v2090 = vpop.f32.mrf.mxu0
      %2091 = vmatprep.mubr.f32.mxu0 0.0
      %2092 = vmatmul.mubr.f32.gmra.mxu0 %v1954
      %v2093 = vpop.f32.mrf.mxu0
      %v2094 = vadd.f32 0.0, %v2093
      %v2095 = vpop.f32.mrf.mxu0
      %2096 = vmatprep.mubr.f32.mxu0 0.0
      %2097 = vmatmul.mubr.f32.gmra.mxu0 %v1957
      %v2098 = vpop.f32.mrf.mxu0
      %v2099 = vadd.f32 0.0, %v2098
      %v2100 = vpop.f32.mrf.mxu0
      %2101 = vmatprep.mubr.f32.mxu0 0.0
      %2102 = vmatmul.mubr.f32.gmra.mxu0 %v1960
      %v2103 = vpop.f32.mrf.mxu0
      %v2104 = vadd.f32 0.0, %v2103
      %v2105 = vpop.f32.mrf.mxu0
      %2106 = vdwg.mxu0
      %v2108 = vsel %vm624, %v958, 0
      %v2111 = vsel %vm624, %v963, 0
      %v2114 = vsel %vm624, %v968, 0
      %v2117 = vsel %vm624, %v973, 0
      %v2120 = vsel %vm624, %v978, 0
      %v2123 = vsel %vm624, %v983, 0
      %v2126 = vsel %vm624, %v988, 0
      %v2129 = vsel %vm624, %v993, 0
      %v2132 = vsel %vm624, %v998, 0
      %v2135 = vsel %vm624, %v1003, 0
      %v2138 = vsel %vm624, %v1008, 0
      %v2141 = vsel %vm624, %v1013, 0
      %v2144 = vsel %vm624, %v1018, 0
      %v2147 = vsel %vm624, %v1023, 0
      %v2150 = vsel %vm624, %v1028, 0
      %v2153 = vsel %vm624, %v1033, 0
      %2155 = vmatprep.subr.mxu0 0.0
      %2156 = vmatpush1.msra.mxu0 0.0
      %2157 = vmatprep.subr.mxu0 0.0
      %2158 = vmatpush1.msra.mxu0 0.0
      %2159 = vmatprep.subr.mxu0 0.0
      %2160 = vmatpush1.msra.mxu0 0.0
      %2161 = vmatprep.subr.mxu0 0.0
      %2162 = vmatpush1.msra.mxu0 0.0
      %2163 = vmatprep.subr.mxu0 0.0
      %2164 = vmatpush1.msra.mxu0 0.0
      %2165 = vmatprep.subr.mxu0 0.0
      %2166 = vmatpush1.msra.mxu0 0.0
      %2167 = vmatprep.subr.mxu0 0.0
      %2168 = vmatpush1.msra.mxu0 0.0
      %2169 = vmatprep.subr.mxu0 0.0
      %2170 = vmatpush1.msra.mxu0 0.0
      %2171 = vmatprep.subr.mxu0 0.0
      %2172 = vmatpush1.msra.mxu0 0.0
      %2173 = vmatprep.subr.mxu0 0.0
      %2174 = vmatpush1.msra.mxu0 0.0
      %2175 = vmatprep.subr.mxu0 0.0
      %2176 = vmatpush1.msra.mxu0 0.0
      %2177 = vmatprep.subr.mxu0 0.0
      %2178 = vmatpush1.msra.mxu0 0.0
      %2179 = vmatprep.subr.mxu0 0.0
      %2180 = vmatpush1.msra.mxu0 0.0
      %2181 = vmatprep.subr.mxu0 0.0
      %2182 = vmatpush1.msra.mxu0 0.0
      %2183 = vmatprep.subr.mxu0 0.0
      %2184 = vmatpush1.msra.mxu0 %v1911
      %2185 = vmatprep.subr.mxu0 0.0
      %2186 = vmatpush1.msra.mxu0 %v1910
      %2187 = vmatprep.subr.mxu0 0.0
      %2188 = vmatpush2.msra.mxu0 0.0
      %2189 = vmatprep.subr.mxu0 0.0
      %2190 = vmatpush2.msra.mxu0 0.0
      %2191 = vmatprep.subr.mxu0 0.0
      %2192 = vmatpush2.msra.mxu0 0.0
      %2193 = vmatprep.subr.mxu0 0.0
      %2194 = vmatpush2.msra.mxu0 0.0
      %2195 = vmatprep.subr.mxu0 0.0
      %2196 = vmatpush2.msra.mxu0 0.0
      %2197 = vmatprep.subr.mxu0 0.0
      %2198 = vmatpush2.msra.mxu0 0.0
      %2199 = vmatprep.subr.mxu0 0.0
      %2200 = vmatpush2.msra.mxu0 0.0
      %2201 = vmatprep.subr.mxu0 0.0
      %2202 = vmatpush2.msra.mxu0 0.0
      %2203 = vmatprep.subr.mxu0 0.0
      %2204 = vmatpush2.msra.mxu0 0.0
      %2205 = vmatprep.subr.mxu0 0.0
      %2206 = vmatpush2.msra.mxu0 0.0
      %2207 = vmatprep.subr.mxu0 0.0
      %2208 = vmatpush2.msra.mxu0 0.0
      %2209 = vmatprep.subr.mxu0 0.0
      %2210 = vmatpush2.msra.mxu0 0.0
      %2211 = vmatprep.subr.mxu0 0.0
      %2212 = vmatpush2.msra.mxu0 0.0
      %2213 = vmatprep.subr.mxu0 0.0
      %2214 = vmatpush2.msra.mxu0 0.0
      %2215 = vmatprep.subr.mxu0 0.0
      %2216 = vmatpush2.msra.mxu0 0.0
      %2217 = vmatprep.subr.mxu0 0.0
      %2218 = vmatpush2.msra.mxu0 0.0
      %2219 = vmatprep.mubr.f32.mxu0 0.0
      %2220 = vmatmul.mubr.f32.gmra.mxu0 %v2108
      %v2221 = vpop.f32.mrf.mxu0
      %v2222 = vadd.f32 %v2029, %v2221
      %v2223 = vpop.f32.mrf.mxu0
      %2224 = vmatprep.mubr.f32.mxu0 0.0
      %2225 = vmatmul.mubr.f32.gmra.mxu0 %v2111
      %v2226 = vpop.f32.mrf.mxu0
      %v2227 = vadd.f32 %v2034, %v2226
      %v2228 = vpop.f32.mrf.mxu0
      %2229 = vmatprep.mubr.f32.mxu0 0.0
      %2230 = vmatmul.mubr.f32.gmra.mxu0 %v2114
      %v2231 = vpop.f32.mrf.mxu0
      %v2232 = vadd.f32 %v2039, %v2231
      %v2233 = vpop.f32.mrf.mxu0
      %2234 = vmatprep.mubr.f32.mxu0 0.0
      %2235 = vmatmul.mubr.f32.gmra.mxu0 %v2117
      %v2236 = vpop.f32.mrf.mxu0
      %v2237 = vadd.f32 %v2044, %v2236
      %v2238 = vpop.f32.mrf.mxu0
      %2239 = vmatprep.mubr.f32.mxu0 0.0
      %2240 = vmatmul.mubr.f32.gmra.mxu0 %v2120
      %v2241 = vpop.f32.mrf.mxu0
      %v2242 = vadd.f32 %v2049, %v2241
      %v2243 = vpop.f32.mrf.mxu0
      %2244 = vmatprep.mubr.f32.mxu0 0.0
      %2245 = vmatmul.mubr.f32.gmra.mxu0 %v2123
      %v2246 = vpop.f32.mrf.mxu0
      %v2247 = vadd.f32 %v2054, %v2246
      %v2248 = vpop.f32.mrf.mxu0
      %2249 = vmatprep.mubr.f32.mxu0 0.0
      %2250 = vmatmul.mubr.f32.gmra.mxu0 %v2126
      %v2251 = vpop.f32.mrf.mxu0
      %v2252 = vadd.f32 %v2059, %v2251
      %v2253 = vpop.f32.mrf.mxu0
      %2254 = vmatprep.mubr.f32.mxu0 0.0
      %2255 = vmatmul.mubr.f32.gmra.mxu0 %v2129
      %v2256 = vpop.f32.mrf.mxu0
      %v2257 = vadd.f32 %v2064, %v2256
      %v2258 = vpop.f32.mrf.mxu0
      %2259 = vmatprep.mubr.f32.mxu0 0.0
      %2260 = vmatmul.mubr.f32.gmra.mxu0 %v2132
      %v2261 = vpop.f32.mrf.mxu0
      %v2262 = vadd.f32 %v2069, %v2261
      %v2263 = vpop.f32.mrf.mxu0
      %2264 = vmatprep.mubr.f32.mxu0 0.0
      %2265 = vmatmul.mubr.f32.gmra.mxu0 %v2135
      %v2266 = vpop.f32.mrf.mxu0
      %v2267 = vadd.f32 %v2074, %v2266
      %v2268 = vpop.f32.mrf.mxu0
      %2269 = vmatprep.mubr.f32.mxu0 0.0
      %2270 = vmatmul.mubr.f32.gmra.mxu0 %v2138
      %v2271 = vpop.f32.mrf.mxu0
      %v2272 = vadd.f32 %v2079, %v2271
      %v2273 = vpop.f32.mrf.mxu0
      %2274 = vmatprep.mubr.f32.mxu0 0.0
      %2275 = vmatmul.mubr.f32.gmra.mxu0 %v2141
      %v2276 = vpop.f32.mrf.mxu0
      %v2277 = vadd.f32 %v2084, %v2276
      %v2278 = vpop.f32.mrf.mxu0
      %2279 = vmatprep.mubr.f32.mxu0 0.0
      %2280 = vmatmul.mubr.f32.gmra.mxu0 %v2144
      %v2281 = vpop.f32.mrf.mxu0
      %v2282 = vadd.f32 %v2089, %v2281
      %v2283 = vpop.f32.mrf.mxu0
      %2284 = vmatprep.mubr.f32.mxu0 0.0
      %2285 = vmatmul.mubr.f32.gmra.mxu0 %v2147
      %v2286 = vpop.f32.mrf.mxu0
      %v2287 = vadd.f32 %v2094, %v2286
      %v2288 = vpop.f32.mrf.mxu0
      %2289 = vmatprep.mubr.f32.mxu0 0.0
      %2290 = vmatmul.mubr.f32.gmra.mxu0 %v2150
      %v2291 = vpop.f32.mrf.mxu0
      %v2292 = vadd.f32 %v2099, %v2291
      %v2293 = vpop.f32.mrf.mxu0
      %2294 = vmatprep.mubr.f32.mxu0 0.0
      %2295 = vmatmul.mubr.f32.gmra.mxu0 %v2153
      %v2296 = vpop.f32.mrf.mxu0
      %v2297 = vadd.f32 %v2104, %v2296
      %v2298 = vpop.f32.mrf.mxu0
      %2299 = vdwg.mxu0
      %v2300 = vld [vmem:[%s14] sm:$0x1]
      %v2302 = vlaneseq
      %v2303 = vshrl.u32 %v2302, 7
      %v2304 = vsub.s32 0, %v2303
      %v2305 = vrot.slane %v2300, %v2304
      %v2307 = vadd.f32 %v2222, %v2305
      %v2308 = vadd.f32 %v2227, %v2305
      %v2309 = vadd.f32 %v2232, %v2305
      %v2310 = vadd.f32 %v2237, %v2305
      %v2311 = vadd.f32 %v2242, %v2305
      %v2312 = vadd.f32 %v2247, %v2305
      %v2313 = vadd.f32 %v2252, %v2305
      %v2314 = vadd.f32 %v2257, %v2305
      %v2315 = vadd.f32 %v2262, %v2305
      %v2316 = vadd.f32 %v2267, %v2305
      %v2317 = vadd.f32 %v2272, %v2305
      %v2318 = vadd.f32 %v2277, %v2305
      %v2319 = vadd.f32 %v2282, %v2305
      %v2320 = vadd.f32 %v2287, %v2305
      %v2321 = vadd.f32 %v2292, %v2305
      %v2322 = vadd.f32 %v2297, %v2305
      %v2323 = vmax.f32 %v2307, 0.0
      %v2324 = vmax.f32 %v2308, 0.0
      %v2325 = vmax.f32 %v2309, 0.0
      %v2326 = vmax.f32 %v2310, 0.0
      %v2327 = vmax.f32 %v2311, 0.0
      %v2328 = vmax.f32 %v2312, 0.0
      %v2329 = vmax.f32 %v2313, 0.0
      %v2330 = vmax.f32 %v2314, 0.0
      %v2331 = vmax.f32 %v2315, 0.0
      %v2332 = vmax.f32 %v2316, 0.0
      %v2333 = vmax.f32 %v2317, 0.0
      %v2334 = vmax.f32 %v2318, 0.0
      %v2335 = vmax.f32 %v2319, 0.0
      %v2336 = vmax.f32 %v2320, 0.0
      %v2337 = vmax.f32 %v2321, 0.0
      %v2338 = vmax.f32 %v2322, 0.0
      %v2339 = vld [vmem:[%s15] sm:$0xff]
      %v2340 = vld [vmem:[%s15 + $0x8] sm:$0xff]
      %v2341 = vld [vmem:[%s15 + $0x10] sm:$0xff]
      %v2342 = vld [vmem:[%s15 + $0x18] sm:$0xff]
      %v2343 = vld [vmem:[%s16] sm:$0x1]
      %v2345 = vlaneseq
      %v2346 = vshrl.u32 %v2345, 7
      %v2347 = vsub.s32 0, %v2346
      %v2348 = vrot.slane %v2343, %v2347
      %vm2350 = vcmask 261120
      %v2352 = vsel %vm2350, %v2323, 0
      %v2355 = vsel %vm2350, %v2324, 0
      %v2358 = vsel %vm2350, %v2325, 0
      %v2361 = vsel %vm2350, %v2326, 0
      %v2364 = vsel %vm2350, %v2327, 0
      %v2367 = vsel %vm2350, %v2328, 0
      %v2370 = vsel %vm2350, %v2329, 0
      %v2373 = vsel %vm2350, %v2330, 0
      %v2376 = vsel %vm2350, %v2331, 0
      %v2379 = vsel %vm2350, %v2332, 0
      %v2382 = vsel %vm2350, %v2333, 0
      %v2385 = vsel %vm2350, %v2334, 0
      %v2388 = vsel %vm2350, %v2335, 0
      %v2391 = vsel %vm2350, %v2336, 0
      %v2394 = vsel %vm2350, %v2337, 0
      %v2397 = vsel %vm2350, %v2338, 0
      %2399 = vmatprep.subr.mxu0 0.0
      %2400 = vmatpush1.msra.mxu0 0.0
      %2401 = vmatprep.subr.mxu0 0.0
      %2402 = vmatpush1.msra.mxu0 0.0
      %2403 = vmatprep.subr.mxu0 0.0
      %2404 = vmatpush1.msra.mxu0 0.0
      %2405 = vmatprep.subr.mxu0 0.0
      %2406 = vmatpush1.msra.mxu0 0.0
      %2407 = vmatprep.subr.mxu0 0.0
      %2408 = vmatpush1.msra.mxu0 0.0
      %2409 = vmatprep.subr.mxu0 0.0
      %2410 = vmatpush1.msra.mxu0 0.0
      %2411 = vmatprep.subr.mxu0 0.0
      %2412 = vmatpush1.msra.mxu0 0.0
      %2413 = vmatprep.subr.mxu0 0.0
      %2414 = vmatpush1.msra.mxu0 0.0
      %2415 = vmatprep.subr.mxu0 0.0
      %2416 = vmatpush1.msra.mxu0 0.0
      %2417 = vmatprep.subr.mxu0 0.0
      %2418 = vmatpush1.msra.mxu0 0.0
      %2419 = vmatprep.subr.mxu0 0.0
      %2420 = vmatpush1.msra.mxu0 0.0
      %2421 = vmatprep.subr.mxu0 0.0
      %2422 = vmatpush1.msra.mxu0 0.0
      %2423 = vmatprep.subr.mxu0 0.0
      %2424 = vmatpush1.msra.mxu0 %v2342
      %2425 = vmatprep.subr.mxu0 0.0
      %2426 = vmatpush1.msra.mxu0 %v2341
      %2427 = vmatprep.subr.mxu0 0.0
      %2428 = vmatpush1.msra.mxu0 %v2340
      %2429 = vmatprep.subr.mxu0 0.0
      %2430 = vmatpush1.msra.mxu0 %v2339
      %2431 = vmatprep.subr.mxu0 0.0
      %2432 = vmatpush2.msra.mxu0 0.0
      %2433 = vmatprep.subr.mxu0 0.0
      %2434 = vmatpush2.msra.mxu0 0.0
      %2435 = vmatprep.subr.mxu0 0.0
      %2436 = vmatpush2.msra.mxu0 0.0
      %2437 = vmatprep.subr.mxu0 0.0
      %2438 = vmatpush2.msra.mxu0 0.0
      %2439 = vmatprep.subr.mxu0 0.0
      %2440 = vmatpush2.msra.mxu0 0.0
      %2441 = vmatprep.subr.mxu0 0.0
      %2442 = vmatpush2.msra.mxu0 0.0
      %2443 = vmatprep.subr.mxu0 0.0
      %2444 = vmatpush2.msra.mxu0 0.0
      %2445 = vmatprep.subr.mxu0 0.0
      %2446 = vmatpush2.msra.mxu0 0.0
      %2447 = vmatprep.subr.mxu0 0.0
      %2448 = vmatpush2.msra.mxu0 0.0
      %2449 = vmatprep.subr.mxu0 0.0
      %2450 = vmatpush2.msra.mxu0 0.0
      %2451 = vmatprep.subr.mxu0 0.0
      %2452 = vmatpush2.msra.mxu0 0.0
      %2453 = vmatprep.subr.mxu0 0.0
      %2454 = vmatpush2.msra.mxu0 0.0
      %2455 = vmatprep.subr.mxu0 0.0
      %2456 = vmatpush2.msra.mxu0 0.0
      %2457 = vmatprep.subr.mxu0 0.0
      %2458 = vmatpush2.msra.mxu0 0.0
      %2459 = vmatprep.subr.mxu0 0.0
      %2460 = vmatpush2.msra.mxu0 0.0
      %2461 = vmatprep.subr.mxu0 0.0
      %2462 = vmatpush2.msra.mxu0 0.0
      %2463 = vmatprep.mubr.f32.mxu0 0.0
      %2464 = vmatmul.mubr.f32.gmra.mxu0 %v2352
      %v2465 = vpop.f32.mrf.mxu0
      %v2466 = vadd.f32 %v2348, %v2465
      %v2467 = vpop.f32.mrf.mxu0
      %2468 = vmatprep.mubr.f32.mxu0 0.0
      %2469 = vmatmul.mubr.f32.gmra.mxu0 %v2355
      %v2470 = vpop.f32.mrf.mxu0
      %v2471 = vadd.f32 %v2348, %v2470
      %v2472 = vpop.f32.mrf.mxu0
      %2473 = vmatprep.mubr.f32.mxu0 0.0
      %2474 = vmatmul.mubr.f32.gmra.mxu0 %v2358
      %v2475 = vpop.f32.mrf.mxu0
      %v2476 = vadd.f32 %v2348, %v2475
      %v2477 = vpop.f32.mrf.mxu0
      %2478 = vmatprep.mubr.f32.mxu0 0.0
      %2479 = vmatmul.mubr.f32.gmra.mxu0 %v2361
      %v2480 = vpop.f32.mrf.mxu0
      %v2481 = vadd.f32 %v2348, %v2480
      %v2482 = vpop.f32.mrf.mxu0
      %2483 = vmatprep.mubr.f32.mxu0 0.0
      %2484 = vmatmul.mubr.f32.gmra.mxu0 %v2364
      %v2485 = vpop.f32.mrf.mxu0
      %v2486 = vadd.f32 %v2348, %v2485
      %v2487 = vpop.f32.mrf.mxu0
      %2488 = vmatprep.mubr.f32.mxu0 0.0
      %2489 = vmatmul.mubr.f32.gmra.mxu0 %v2367
      %v2490 = vpop.f32.mrf.mxu0
      %v2491 = vadd.f32 %v2348, %v2490
      %v2492 = vpop.f32.mrf.mxu0
      %2493 = vmatprep.mubr.f32.mxu0 0.0
      %2494 = vmatmul.mubr.f32.gmra.mxu0 %v2370
      %v2495 = vpop.f32.mrf.mxu0
      %v2496 = vadd.f32 %v2348, %v2495
      %v2497 = vpop.f32.mrf.mxu0
      %2498 = vmatprep.mubr.f32.mxu0 0.0
      %2499 = vmatmul.mubr.f32.gmra.mxu0 %v2373
      %v2500 = vpop.f32.mrf.mxu0
      %v2501 = vadd.f32 %v2348, %v2500
      %v2502 = vpop.f32.mrf.mxu0
      %2503 = vmatprep.mubr.f32.mxu0 0.0
      %2504 = vmatmul.mubr.f32.gmra.mxu0 %v2376
      %v2505 = vpop.f32.mrf.mxu0
      %v2506 = vadd.f32 %v2348, %v2505
      %v2507 = vpop.f32.mrf.mxu0
      %2508 = vmatprep.mubr.f32.mxu0 0.0
      %2509 = vmatmul.mubr.f32.gmra.mxu0 %v2379
      %v2510 = vpop.f32.mrf.mxu0
      %v2511 = vadd.f32 %v2348, %v2510
      %v2512 = vpop.f32.mrf.mxu0
      %2513 = vmatprep.mubr.f32.mxu0 0.0
      %2514 = vmatmul.mubr.f32.gmra.mxu0 %v2382
      %v2515 = vpop.f32.mrf.mxu0
      %v2516 = vadd.f32 %v2348, %v2515
      %v2517 = vpop.f32.mrf.mxu0
      %2518 = vmatprep.mubr.f32.mxu0 0.0
      %2519 = vmatmul.mubr.f32.gmra.mxu0 %v2385
      %v2520 = vpop.f32.mrf.mxu0
      %v2521 = vadd.f32 %v2348, %v2520
      %v2522 = vpop.f32.mrf.mxu0
      %2523 = vmatprep.mubr.f32.mxu0 0.0
      %2524 = vmatmul.mubr.f32.gmra.mxu0 %v2388
      %v2525 = vpop.f32.mrf.mxu0
      %v2526 = vadd.f32 %v2348, %v2525
      %v2527 = vpop.f32.mrf.mxu0
      %2528 = vmatprep.mubr.f32.mxu0 0.0
      %2529 = vmatmul.mubr.f32.gmra.mxu0 %v2391
      %v2530 = vpop.f32.mrf.mxu0
      %v2531 = vadd.f32 %v2348, %v2530
      %v2532 = vpop.f32.mrf.mxu0
      %2533 = vmatprep.mubr.f32.mxu0 0.0
      %2534 = vmatmul.mubr.f32.gmra.mxu0 %v2394
      %v2535 = vpop.f32.mrf.mxu0
      %v2536 = vadd.f32 %v2348, %v2535
      %v2537 = vpop.f32.mrf.mxu0
      %2538 = vmatprep.mubr.f32.mxu0 0.0
      %2539 = vmatmul.mubr.f32.gmra.mxu0 %v2397
      %v2540 = vpop.f32.mrf.mxu0
      %v2541 = vadd.f32 %v2348, %v2540
      %v2542 = vpop.f32.mrf.mxu0
      %2543 = vdwg.mxu0
      %2544 = vst.msk [vmem:[%s597] sm:$0xff] %vm1167, %v2466
      %2545 = vst.msk [vmem:[%s597 + $0x8] sm:$0xff] %vm1167, %v2471
      %2546 = vst.msk [vmem:[%s597 + $0x10] sm:$0xff] %vm1167, %v2476
      %2547 = vst.msk [vmem:[%s597 + $0x18] sm:$0xff] %vm1167, %v2481
      %2548 = vst.msk [vmem:[%s597 + $0x20] sm:$0xff] %vm1167, %v2486
      %2549 = vst.msk [vmem:[%s597 + $0x28] sm:$0xff] %vm1167, %v2491
      %2550 = vst.msk [vmem:[%s597 + $0x30] sm:$0xff] %vm1167, %v2496
      %2551 = vst.msk [vmem:[%s597 + $0x38] sm:$0xff] %vm1167, %v2501
      %2552 = vst.msk [vmem:[%s597 + $0x40] sm:$0xff] %vm1167, %v2506
      %2553 = vst.msk [vmem:[%s597 + $0x48] sm:$0xff] %vm1167, %v2511
      %2554 = vst.msk [vmem:[%s597 + $0x50] sm:$0xff] %vm1167, %v2516
      %2555 = vst.msk [vmem:[%s597 + $0x58] sm:$0xff] %vm1167, %v2521
      %2556 = vst.msk [vmem:[%s597 + $0x60] sm:$0xff] %vm1167, %v2526
      %2557 = vst.msk [vmem:[%s597 + $0x68] sm:$0xff] %vm1167, %v2531
      %2558 = vst.msk [vmem:[%s597 + $0x70] sm:$0xff] %vm1167, %v2536
      %2559 = vst.msk [vmem:[%s597 + $0x78] sm:$0xff] %vm1167, %v2541
      %s2560 = smul.u32 16, %s28
      %p2561 = scmp.lt.s32.totalorder %s2560, 31
      %s2562 = scalar_select %p2561, %s2560, 31
      %s2563 = smul.addr %s2562, 8
      %s2564 = scalar_lea.vmem %s17, %s2563
      // Predicated region
      $region89: #{tpu_custom_call.1} parent=87 // pred_check
        %p2565 = pneg %p418
      $region90: #{tpu_custom_call.1} parent=87 // pred_check_branch
        %2567 = sbr.rel (%p2565) target = $region92
      $region91: #{tpu_custom_call.1} parent=87 // pred_region
        %s2568 = smul.u32 16, %s28
      $region92: #{tpu_custom_call.1} parent=87 // pred_fallthru
        _
    $region88: #{tpu_custom_call.1} parent=5 // pred_fallthru
      _
    %p2569 = scmp.le.s32.totalorder 2, %s23
    // Predicated region
    $region93: #{tpu_custom_call.1} parent=5 // pred_check
      %p2570 = pneg %p2569
    $region94: #{tpu_custom_call.1} parent=5 // pred_check_branch
      %2572 = sbr.rel (%p2570) target = $region96
    $region95: #{tpu_custom_call.1} parent=5 // pred_region
      %s2573 = ssub.s32 %s23, 2
      // Predicated region
      $region97: #{tpu_custom_call.1} parent=95 // pred_check
        %p2574 = pneg %p424
      $region98: #{tpu_custom_call.1} parent=95 // pred_check_branch
        %2576 = sbr.rel (%p2574) target = $region100
      $region99: #{tpu_custom_call.1} parent=95 // pred_region
        %s2577 = smul.u32 16, %s29
        %p2578 = scmp.lt.s32.totalorder %s2577, 31
        %s2579 = scalar_select %p2578, %s2577, 31
        %s2580 = smul.addr %s2579, 8
        %s2581 = scalar_lea.vmem %s17, %s2580
      $region100: #{tpu_custom_call.1} parent=95 // pred_fallthru
        _
    $region96: #{tpu_custom_call.1} parent=5 // pred_fallthru
      _
  $region6: #{tpu_custom_call.1} parent=0 // loop_footer
    %s27 = sadd.s32 1, %s23
  $region7: #{tpu_custom_call.1} parent=0 // loop_footer_branch
    %22 = sbr.rel target = $region3
  $region8: #{tpu_custom_call.1} parent=0 // loop_exit
    _

</llo_original>
